<compile_context>
chip_gen: v5e
topology: v5e:2x2
jax: 0.10.0
libtpu: 0.0.40
codegen_flags: <defaults>
</compile_context>

<pallas_src>
import functools

import jax
import jax.numpy as jnp
from jax import lax
from jax.experimental import pallas as pl
from jax.experimental.pallas import tpu as pltpu


def _layernorm(v, g, b, eps=1e-6):
    mu = jnp.mean(v, axis=-1, keepdims=True)
    var = jnp.mean((v - mu) ** 2, axis=-1, keepdims=True)
    return (v - mu) * lax.rsqrt(var + eps) * g + b


def block_kernel(x_ref,
                 ln1_g_ref, ln1_b_ref,
                 qkv_w_ref, qkv_b_ref,
                 proj_w_ref, proj_b_ref,
                 ln2_g_ref, ln2_b_ref,
                 fc1_w_ref, fc1_b_ref,
                 fc2_w_ref, fc2_b_ref,
                 o_ref,
                 *, bt, n_tokens, n_heads, head_dim):
    D = n_heads * head_dim
    R = bt * n_tokens            # rows in the flattened (Bt*N, D) slab
    G = n_heads * bt             # attention groups: (head, sample) pairs

    # (Bt, N, D) -> (Bt*N, D): leading-dim merge only, no lane relayout.
    x = x_ref[...].astype(jnp.float32).reshape(R, D)

    # ---------------- Attention branch ----------------
    h = _layernorm(x, ln1_g_ref[0], ln1_b_ref[0])
    # softmax scale (1/sqrt(head_dim)) is pre-folded into qkv_w/qkv_b's q columns.
    qkv = jnp.dot(h.astype(jnp.bfloat16), qkv_w_ref[...],
                  preferred_element_type=jnp.float32) + qkv_b_ref[0]

    # Move the head index from lanes to a leading batch axis once per grid step;
    # everything downstream is a single head+sample-batched einsum (no per-sample
    # Python loop, no per-head matmuls).
    def heads_of(col0):
        parts = [
            qkv[:, col0 + hh * head_dim: col0 + (hh + 1) * head_dim].astype(jnp.bfloat16)
            for hh in range(n_heads)
        ]
        stacked = jnp.stack(parts, axis=0)                # (n_heads, R, hd)
        # (n_heads, Bt*N, hd) -> (n_heads*Bt, N, hd): leading-dim split/merge only.
        return stacked.reshape(G, n_tokens, head_dim)

    qg = heads_of(0)
    kg = heads_of(D)
    vg = heads_of(2 * D)

    # One batched MXU stream for all (head, sample) groups.
    s = jnp.einsum('gqd,gkd->gqk', qg, kg, preferred_element_type=jnp.float32)
    s = s - jnp.max(s, axis=-1, keepdims=True)
    e = jnp.exp(s)
    inv = pl.reciprocal(jnp.sum(e, axis=-1, keepdims=True), approx=True)
    attn = (e * inv).astype(jnp.bfloat16)                 # softmax over keys
    wa_g = jnp.einsum('gqk,gkd->gqd', attn, vg, preferred_element_type=jnp.float32)

    # Head merge folded into the projection: proj_w arrives pre-reshaped head-major
    # as (n_heads, head_dim, D), so no n_heads-way lane concat is needed.
    wa_heads = wa_g.reshape(n_heads, R, head_dim).astype(jnp.bfloat16)
    proj_parts = jnp.einsum('hrd,hdc->hrc', wa_heads, proj_w_ref[...],
                            preferred_element_type=jnp.float32)
    attn_out = jnp.sum(proj_parts, axis=0) + proj_b_ref[0]
    x1 = x + attn_out                                     # residual 1

    # ---------------- MLP branch ----------------
    h2 = _layernorm(x1, ln2_g_ref[0], ln2_b_ref[0])
    f1 = jnp.dot(h2.astype(jnp.bfloat16), fc1_w_ref[...],
                 preferred_element_type=jnp.float32) + fc1_b_ref[0]
    # tanh-approximate GELU: tanh runs on the EUP (separate VLIW slot) instead of a
    # long erf VPU polynomial over the (R, H) slab; max deviation ~3e-3, absorbed
    # by the kernel's bf16/approx tolerance.
    c0 = jnp.float32(0.7978845608028654)                  # sqrt(2/pi)
    g1 = 0.5 * f1 * (1.0 + jnp.tanh(c0 * (f1 + 0.044715 * (f1 * f1 * f1))))
    f2 = jnp.dot(g1.astype(jnp.bfloat16), fc2_w_ref[...],
                 preferred_element_type=jnp.float32) + fc2_b_ref[0]

    o_ref[...] = (x1 + f2).reshape(bt, n_tokens, D).astype(o_ref.dtype)  # residual 2


def prepare_block_params(params, *, n_heads):
    """One-time parameter prep (call once, outside the per-invocation path):
    bf16 matmul weights, softmax scale folded into the q columns, proj weight
    pre-reshaped head-major."""
    D = params["qkv_w"].shape[0]
    head_dim = D // n_heads
    scale = jnp.float32(head_dim ** (-0.5))
    col_scale = jnp.concatenate(
        [jnp.full((D,), scale, jnp.float32), jnp.ones((2 * D,), jnp.float32)])
    qkv_w = params["qkv_w"].astype(jnp.float32) * col_scale[None, :]
    qkv_b = params["qkv_b"].astype(jnp.float32) * col_scale[None, :]
    # proj_w's input rows are the head-major concat of weighted_avg, so this
    # reshape preserves the head ordering exactly.
    proj_w = params["proj_w"].astype(jnp.float32).reshape(n_heads, head_dim, D)
    return {
        "ln1_g": params["ln1_g"].astype(jnp.float32),
        "ln1_b": params["ln1_b"].astype(jnp.float32),
        "qkv_w": qkv_w.astype(jnp.bfloat16),
        "qkv_b": qkv_b,
        "proj_w": proj_w.astype(jnp.bfloat16),
        "proj_b": params["proj_b"].astype(jnp.float32),
        "ln2_g": params["ln2_g"].astype(jnp.float32),
        "ln2_b": params["ln2_b"].astype(jnp.float32),
        "fc1_w": params["fc1_w"].astype(jnp.bfloat16),
        "fc1_b": params["fc1_b"].astype(jnp.float32),
        "fc2_w": params["fc2_w"].astype(jnp.bfloat16),
        "fc2_b": params["fc2_b"].astype(jnp.float32),
    }


def _vmem_capacity_bytes():
    try:
        # 128 MiB on v5e/v6e, 64 MiB per TC on v7x.
        return int(pltpu.get_tpu_info().vmem_capacity_bytes)
    except Exception:
        return 64 * 1024 * 1024                            # conservative fallback (v7x)


def _vmem_bytes_per_step(bt, N, D, H, n_heads):
    """Rough per-grid-step VMEM footprint, including attention intermediates."""
    hd = D // n_heads
    R = bt * N
    G = n_heads * bt
    w = 2 * (D * 3 * D + n_heads * hd * D + D * H + H * D)  # bf16 matmul weights
    small = 4 * (4 * D + 3 * D + H + D)                     # f32 LN params + biases
    io = 2 * 2 * (4 * bt * N * D)                           # x + out, double-buffered f32
    act = 4 * R * 3 * D                                     # qkv slab f32
    act += 2 * 3 * G * N * hd                               # q/k/v head stacks bf16
    act += G * N * N * (4 + 4 + 2)                          # scores + exp f32, attn bf16
    act += 4 * G * N * hd + 2 * n_heads * R * hd            # attn@v f32 + bf16 copy
    act += 4 * n_heads * R * D                              # per-head proj partials f32
    act += 4 * R * 3 * D                                    # h / x1 / h2 slabs f32
    act += 4 * 2 * R * H                                    # fc1 out + gelu f32
    return 2 * w + small + io + act                         # weights counted double-buffered


def _pick_batch_tile(B, N, D, H, n_heads, vmem_budget, max_rows):
    """Largest Bt whose per-step footprint fits the budget, keeping >=2 grid steps
    (so the 'parallel' batch axis can shard across v7x's two TensorCores)."""
    hi = max(1, min(B - 1 if B >= 2 else B, max(1, max_rows // max(N, 1))))
    best = 1
    for bt in range(1, hi + 1):
        if _vmem_bytes_per_step(bt, N, D, H, n_heads) <= int(0.8 * vmem_budget):
            best = bt
    # Prefer an exact divisor of B (no padded tail) unless it costs >25% of Bt.
    for bt in range(best, 0, -1):
        if B % bt == 0:
            return bt if bt * 4 >= best * 3 else best
    return best


def vit_block(x, prepared, *, n_heads):
    B, N, D = x.shape
    head_dim = D // n_heads
    H = prepared["fc1_w"].shape[1]

    cap = _vmem_capacity_bytes()
    max_rows = 2048 if cap >= 100 * 1024 * 1024 else 1024   # bigger slabs on 128 MiB chips
    Bt = _pick_batch_tile(B, N, D, H, n_heads, cap, max_rows)

    # Pad the batch to a multiple of Bt so ragged batches keep the VMEM-derived Bt.
    n_steps = pl.cdiv(B, Bt)
    Bp = n_steps * Bt
    x_in = x if Bp == B else jnp.concatenate(
        [x, jnp.zeros((Bp - B, N, D), x.dtype)], axis=0)

    est = _vmem_bytes_per_step(Bt, N, D, H, n_heads)
    vmem_limit = int(min(int(0.85 * cap), 112 * 1024 * 1024,
                         max(32 * 1024 * 1024, int(1.5 * est))))

    kernel = functools.partial(block_kernel, bt=Bt, n_tokens=N,
                               n_heads=n_heads, head_dim=head_dim)

    full = lambda shape: pl.BlockSpec(shape, lambda b: (0,) * len(shape))
    in_specs = [
        pl.BlockSpec((Bt, N, D), lambda b: (b, 0, 0)),       # x (Bt samples per step)
        full((1, D)), full((1, D)),                          # ln1 gamma/beta
        full((D, 3 * D)), full((1, 3 * D)),                  # qkv w/b (scale folded in)
        full((n_heads, head_dim, D)), full((1, D)),          # proj w (head-major) / b
        full((1, D)), full((1, D)),                          # ln2 gamma/beta
        full((D, H)), full((1, H)),                          # fc1 w/b
        full((H, D)), full((1, D)),                          # fc2 w/b
    ]

    out = pl.pallas_call(
        kernel,
        out_shape=jax.ShapeDtypeStruct((Bp, N, D), x.dtype),
        grid_spec=pltpu.PrefetchScalarGridSpec(
            num_scalar_prefetch=0,
            grid=(n_steps,),
            in_specs=in_specs,
            out_specs=pl.BlockSpec((Bt, N, D), lambda b: (b, 0, 0)),
        ),
        compiler_params=pltpu.CompilerParams(
            dimension_semantics=("parallel",),               # batch steps independent
            vmem_limit_bytes=vmem_limit,
        ),
    )(x_in,
      prepared["ln1_g"], prepared["ln1_b"],
      prepared["qkv_w"], prepared["qkv_b"],
      prepared["proj_w"], prepared["proj_b"],
      prepared["ln2_g"], prepared["ln2_b"],
      prepared["fc1_w"], prepared["fc1_b"],
      prepared["fc2_w"], prepared["fc2_b"])
    return out if Bp == B else out[:B]


def reference_block(x, params, *, n_heads):
    """Pure-JAX f32 reference mirroring the PyTorch Block forward (exact GELU)."""
    B, N, D = x.shape
    hd = D // n_heads
    scale = hd ** (-0.5)

    def ln(v, g, b):
        mu = v.mean(-1, keepdims=True)
        var = ((v - mu) ** 2).mean(-1, keepdims=True)
        return (v - mu) / jnp.sqrt(var + 1e-6) * g + b

    h = ln(x, params["ln1_g"][0], params["ln1_b"][0])
    qkv = h @ params["qkv_w"] + params["qkv_b"][0]
    qkv = qkv.reshape(B, N, 3, n_heads, hd).transpose(2, 0, 3, 1, 4)
    q, k, v = qkv[0], qkv[1], qkv[2]
    dp = (q @ k.transpose(0, 1, 3, 2)) * scale
    attn = jax.nn.softmax(dp, axis=-1)
    wa = (attn @ v).transpose(0, 2, 1, 3).reshape(B, N, D)
    x1 = x + wa @ params["proj_w"] + params["proj_b"][0]

    h2 = ln(x1, params["ln2_g"][0], params["ln2_b"][0])
    f1 = h2 @ params["fc1_w"] + params["fc1_b"][0]
    g1 = jax.nn.gelu(f1, approximate=False)
    f2 = g1 @ params["fc2_w"] + params["fc2_b"][0]
    return x1 + f2


if __name__ == "__main__":
    # Small shapes consistent with the module: B=2, tokens N=8, dim D=32,
    # n_heads=4 (head_dim=8), mlp_ratio=4 -> hidden H=128.
    B, N, D, n_heads = 2, 8, 32, 4
    H = int(D * 4.0)

    key = jax.random.PRNGKey(0)
    ks = jax.random.split(key, 8)
    params = {
        "ln1_g": jnp.ones((1, D), jnp.float32),
        "ln1_b": jnp.zeros((1, D), jnp.float32),
        "qkv_w": 0.02 * jax.random.normal(ks[0], (D, 3 * D), jnp.float32),
        "qkv_b": 0.01 * jax.random.normal(ks[1], (1, 3 * D), jnp.float32),
        "proj_w": 0.02 * jax.random.normal(ks[2], (D, D), jnp.float32),
        "proj_b": 0.01 * jax.random.normal(ks[3], (1, D), jnp.float32),
        "ln2_g": jnp.ones((1, D), jnp.float32),
        "ln2_b": jnp.zeros((1, D), jnp.float32),
        "fc1_w": 0.02 * jax.random.normal(ks[4], (D, H), jnp.float32),
        "fc1_b": 0.01 * jax.random.normal(ks[5], (1, H), jnp.float32),
        "fc2_w": 0.02 * jax.random.normal(ks[6], (H, D), jnp.float32),
        "fc2_b": 0.01 * jax.random.normal(ks[7], (1, D), jnp.float32),
    }

    x = jax.random.normal(jax.random.PRNGKey(1), (B, N, D), jnp.float32)

    prepared = prepare_block_params(params, n_heads=n_heads)   # one-time weight prep
    out = vit_block(x, prepared, n_heads=n_heads)
    out = jax.block_until_ready(out)

    ref = reference_block(x, params, n_heads=n_heads)
    assert out.shape == (B, N, D)
    # Tolerance loosened vs. a pure-f32 path: bf16 matmul operands, approximate EUP
    # reciprocal in the softmax denominator, tanh-approximate GELU.
    assert jnp.allclose(out, ref, atol=2e-2, rtol=2e-2), "mismatch vs reference"

    print("KERNEL_OK")
</pallas_src>

<mosaic_0001>
module attributes {stable_mosaic.version = 11 : i64} {
  func.func @block_kernel(%arg0: i32, %arg1: memref<1x8x32xf32, #tpu.memory_space<vmem>>, %arg2: memref<1x32xf32, #tpu.memory_space<vmem>>, %arg3: memref<1x32xf32, #tpu.memory_space<vmem>>, %arg4: memref<32x96xbf16, #tpu.memory_space<vmem>>, %arg5: memref<1x96xf32, #tpu.memory_space<vmem>>, %arg6: memref<4x8x32xbf16, #tpu.memory_space<vmem>>, %arg7: memref<1x32xf32, #tpu.memory_space<vmem>>, %arg8: memref<1x32xf32, #tpu.memory_space<vmem>>, %arg9: memref<1x32xf32, #tpu.memory_space<vmem>>, %arg10: memref<32x128xbf16, #tpu.memory_space<vmem>>, %arg11: memref<1x128xf32, #tpu.memory_space<vmem>>, %arg12: memref<128x32xbf16, #tpu.memory_space<vmem>>, %arg13: memref<1x32xf32, #tpu.memory_space<vmem>>, %arg14: memref<1x8x32xf32, #tpu.memory_space<vmem>>) attributes {dimension_semantics = [#tpu.dimension_semantics<parallel>], iteration_bounds = array<i64: 2>, scalar_prefetch = 0 : i64, scratch_operands = 0 : i64, tpu.core_type = #tpu.core_type<tc>, window_params = [{transform_indices = @transform_0, window_bounds = array<i64: 1, 8, 32>}, {pipeline_mode = #tpu.pipeline_mode<synchronous>, transform_indices = @transform_1, window_bounds = array<i64: 1, 32>}, {pipeline_mode = #tpu.pipeline_mode<synchronous>, transform_indices = @transform_2, window_bounds = array<i64: 1, 32>}, {pipeline_mode = #tpu.pipeline_mode<synchronous>, transform_indices = @transform_3, window_bounds = array<i64: 32, 96>}, {pipeline_mode = #tpu.pipeline_mode<synchronous>, transform_indices = @transform_4, window_bounds = array<i64: 1, 96>}, {pipeline_mode = #tpu.pipeline_mode<synchronous>, transform_indices = @transform_5, window_bounds = array<i64: 4, 8, 32>}, {pipeline_mode = #tpu.pipeline_mode<synchronous>, transform_indices = @transform_6, window_bounds = array<i64: 1, 32>}, {pipeline_mode = #tpu.pipeline_mode<synchronous>, transform_indices = @transform_7, window_bounds = array<i64: 1, 32>}, {pipeline_mode = #tpu.pipeline_mode<synchronous>, transform_indices = @transform_8, window_bounds = array<i64: 1, 32>}, {pipeline_mode = #tpu.pipeline_mode<synchronous>, transform_indices = @transform_9, window_bounds = array<i64: 32, 128>}, {pipeline_mode = #tpu.pipeline_mode<synchronous>, transform_indices = @transform_10, window_bounds = array<i64: 1, 128>}, {pipeline_mode = #tpu.pipeline_mode<synchronous>, transform_indices = @transform_11, window_bounds = array<i64: 128, 32>}, {pipeline_mode = #tpu.pipeline_mode<synchronous>, transform_indices = @transform_12, window_bounds = array<i64: 1, 32>}, {transform_indices = @transform_13, window_bounds = array<i64: 1, 8, 32>}]} {
    %c0 = arith.constant 0 : index
    %c0_0 = arith.constant 0 : index
    %c0_1 = arith.constant 0 : index
    %0 = vector.load %arg1[%c0, %c0_0, %c0_1] : memref<1x8x32xf32, #tpu.memory_space<vmem>>, vector<1x8x32xf32>
    %1 = vector.shape_cast %0 : vector<1x8x32xf32> to vector<8x32xf32>
    %c0_2 = arith.constant 0 : index
    %c0_3 = arith.constant 0 : index
    %2 = vector.load %arg2[%c0_2, %c0_3] : memref<1x32xf32, #tpu.memory_space<vmem>>, vector<1x32xf32>
    %3 = vector.shape_cast %2 : vector<1x32xf32> to vector<32xf32>
    %c0_4 = arith.constant 0 : index
    %c0_5 = arith.constant 0 : index
    %4 = vector.load %arg3[%c0_4, %c0_5] : memref<1x32xf32, #tpu.memory_space<vmem>>, vector<1x32xf32>
    %5 = vector.shape_cast %4 : vector<1x32xf32> to vector<32xf32>
    %cst = arith.constant dense<0.000000e+00> : vector<8xf32>
    %6 = vector.multi_reduction <add>, %1, %cst [1] : vector<8x32xf32> to vector<8xf32>
    %7 = vector.shape_cast %6 : vector<8xf32> to vector<8x1xf32>
    %cst_6 = arith.constant 3.200000e+01 : f32
    %8 = vector.broadcast %cst_6 : f32 to vector<8x1xf32>
    %9 = arith.divf %7, %8 : vector<8x1xf32>
    %10 = vector.broadcast %9 : vector<8x1xf32> to vector<8x32xf32>
    %11 = arith.subf %1, %10 : vector<8x32xf32>
    %12 = arith.mulf %11, %11 : vector<8x32xf32>
    %cst_7 = arith.constant dense<0.000000e+00> : vector<8xf32>
    %13 = vector.multi_reduction <add>, %12, %cst_7 [1] : vector<8x32xf32> to vector<8xf32>
    %14 = vector.shape_cast %13 : vector<8xf32> to vector<8x1xf32>
    %cst_8 = arith.constant 3.200000e+01 : f32
    %15 = vector.broadcast %cst_8 : f32 to vector<8x1xf32>
    %16 = arith.divf %14, %15 : vector<8x1xf32>
    %17 = vector.broadcast %9 : vector<8x1xf32> to vector<8x32xf32>
    %18 = arith.subf %1, %17 : vector<8x32xf32>
    %cst_9 = arith.constant 9.99999997E-7 : f32
    %19 = vector.broadcast %cst_9 : f32 to vector<8x1xf32>
    %20 = arith.addf %16, %19 : vector<8x1xf32>
    %21 = math.rsqrt %20 : vector<8x1xf32>
    %22 = vector.broadcast %21 : vector<8x1xf32> to vector<8x32xf32>
    %23 = arith.mulf %18, %22 : vector<8x32xf32>
    %24 = vector.shape_cast %3 : vector<32xf32> to vector<1x32xf32>
    %25 = vector.broadcast %24 : vector<1x32xf32> to vector<8x32xf32>
    %26 = arith.mulf %23, %25 : vector<8x32xf32>
    %27 = vector.shape_cast %5 : vector<32xf32> to vector<1x32xf32>
    %28 = vector.broadcast %27 : vector<1x32xf32> to vector<8x32xf32>
    %29 = arith.addf %26, %28 : vector<8x32xf32>
    %30 = arith.truncf %29 : vector<8x32xf32> to vector<8x32xbf16>
    %c0_10 = arith.constant 0 : index
    %c0_11 = arith.constant 0 : index
    %31 = vector.load %arg4[%c0_10, %c0_11] : memref<32x96xbf16, #tpu.memory_space<vmem>>, vector<32x96xbf16>
    %cst_12 = arith.constant dense<0.000000e+00> : vector<8x96xf32>
    %32 = tpu.matmul %30, %31, %cst_12 {dimension_numbers = #tpu.dot_dimension_numbers<[1], [0], [0], [1], [0, 0, 1, 1], [], []>} : vector<8x32xbf16>, vector<32x96xbf16>, vector<8x96xf32> -> vector<8x96xf32>
    %c0_13 = arith.constant 0 : index
    %c0_14 = arith.constant 0 : index
    %33 = vector.load %arg5[%c0_13, %c0_14] : memref<1x96xf32, #tpu.memory_space<vmem>>, vector<1x96xf32>
    %34 = vector.shape_cast %33 : vector<1x96xf32> to vector<96xf32>
    %35 = vector.shape_cast %34 : vector<96xf32> to vector<1x96xf32>
    %36 = vector.broadcast %35 : vector<1x96xf32> to vector<8x96xf32>
    %37 = arith.addf %32, %36 : vector<8x96xf32>
    %38 = vector.extract_strided_slice %37 {offsets = [0, 0], sizes = [8, 8], strides = [1, 1]} : vector<8x96xf32> to vector<8x8xf32>
    %39 = arith.truncf %38 : vector<8x8xf32> to vector<8x8xbf16>
    %40 = vector.extract_strided_slice %37 {offsets = [0, 8], sizes = [8, 8], strides = [1, 1]} : vector<8x96xf32> to vector<8x8xf32>
    %41 = arith.truncf %40 : vector<8x8xf32> to vector<8x8xbf16>
    %42 = vector.extract_strided_slice %37 {offsets = [0, 16], sizes = [8, 8], strides = [1, 1]} : vector<8x96xf32> to vector<8x8xf32>
    %43 = arith.truncf %42 : vector<8x8xf32> to vector<8x8xbf16>
    %44 = vector.extract_strided_slice %37 {offsets = [0, 24], sizes = [8, 8], strides = [1, 1]} : vector<8x96xf32> to vector<8x8xf32>
    %45 = arith.truncf %44 : vector<8x8xf32> to vector<8x8xbf16>
    %46 = vector.shape_cast %39 : vector<8x8xbf16> to vector<1x8x8xbf16>
    %47 = vector.shape_cast %41 : vector<8x8xbf16> to vector<1x8x8xbf16>
    %48 = vector.shape_cast %43 : vector<8x8xbf16> to vector<1x8x8xbf16>
    %49 = vector.shape_cast %45 : vector<8x8xbf16> to vector<1x8x8xbf16>
    %50 = tpu.concatenate %46, %47, %48, %49 in 0 : vector<1x8x8xbf16>, vector<1x8x8xbf16>, vector<1x8x8xbf16>, vector<1x8x8xbf16> -> vector<4x8x8xbf16>
    %51 = vector.extract_strided_slice %37 {offsets = [0, 32], sizes = [8, 8], strides = [1, 1]} : vector<8x96xf32> to vector<8x8xf32>
    %52 = arith.truncf %51 : vector<8x8xf32> to vector<8x8xbf16>
    %53 = vector.extract_strided_slice %37 {offsets = [0, 40], sizes = [8, 8], strides = [1, 1]} : vector<8x96xf32> to vector<8x8xf32>
    %54 = arith.truncf %53 : vector<8x8xf32> to vector<8x8xbf16>
    %55 = vector.extract_strided_slice %37 {offsets = [0, 48], sizes = [8, 8], strides = [1, 1]} : vector<8x96xf32> to vector<8x8xf32>
    %56 = arith.truncf %55 : vector<8x8xf32> to vector<8x8xbf16>
    %57 = vector.extract_strided_slice %37 {offsets = [0, 56], sizes = [8, 8], strides = [1, 1]} : vector<8x96xf32> to vector<8x8xf32>
    %58 = arith.truncf %57 : vector<8x8xf32> to vector<8x8xbf16>
    %59 = vector.shape_cast %52 : vector<8x8xbf16> to vector<1x8x8xbf16>
    %60 = vector.shape_cast %54 : vector<8x8xbf16> to vector<1x8x8xbf16>
    %61 = vector.shape_cast %56 : vector<8x8xbf16> to vector<1x8x8xbf16>
    %62 = vector.shape_cast %58 : vector<8x8xbf16> to vector<1x8x8xbf16>
    %63 = tpu.concatenate %59, %60, %61, %62 in 0 : vector<1x8x8xbf16>, vector<1x8x8xbf16>, vector<1x8x8xbf16>, vector<1x8x8xbf16> -> vector<4x8x8xbf16>
    %64 = vector.extract_strided_slice %37 {offsets = [0, 64], sizes = [8, 8], strides = [1, 1]} : vector<8x96xf32> to vector<8x8xf32>
    %65 = arith.truncf %64 : vector<8x8xf32> to vector<8x8xbf16>
    %66 = vector.extract_strided_slice %37 {offsets = [0, 72], sizes = [8, 8], strides = [1, 1]} : vector<8x96xf32> to vector<8x8xf32>
    %67 = arith.truncf %66 : vector<8x8xf32> to vector<8x8xbf16>
    %68 = vector.extract_strided_slice %37 {offsets = [0, 80], sizes = [8, 8], strides = [1, 1]} : vector<8x96xf32> to vector<8x8xf32>
    %69 = arith.truncf %68 : vector<8x8xf32> to vector<8x8xbf16>
    %70 = vector.extract_strided_slice %37 {offsets = [0, 88], sizes = [8, 8], strides = [1, 1]} : vector<8x96xf32> to vector<8x8xf32>
    %71 = arith.truncf %70 : vector<8x8xf32> to vector<8x8xbf16>
    %72 = vector.shape_cast %65 : vector<8x8xbf16> to vector<1x8x8xbf16>
    %73 = vector.shape_cast %67 : vector<8x8xbf16> to vector<1x8x8xbf16>
    %74 = vector.shape_cast %69 : vector<8x8xbf16> to vector<1x8x8xbf16>
    %75 = vector.shape_cast %71 : vector<8x8xbf16> to vector<1x8x8xbf16>
    %76 = tpu.concatenate %72, %73, %74, %75 in 0 : vector<1x8x8xbf16>, vector<1x8x8xbf16>, vector<1x8x8xbf16>, vector<1x8x8xbf16> -> vector<4x8x8xbf16>
    "tpu.trace_start"() <{level = 10 : i32, message = "gqd,gkd->gqk"}> : () -> ()
    %cst_15 = arith.constant dense<0.000000e+00> : vector<4x8x8xf32>
    %77 = tpu.matmul %50, %63, %cst_15 {dimension_numbers = #tpu.dot_dimension_numbers<[2], [2], [1], [1], [0, 0, 0, 1, 1, 1], [0], [0]>} : vector<4x8x8xbf16>, vector<4x8x8xbf16>, vector<4x8x8xf32> -> vector<4x8x8xf32>
    "tpu.trace_stop"() : () -> ()
    %cst_16 = arith.constant dense<0xFF800000> : vector<4x8xf32>
    %78 = vector.multi_reduction <maximumf>, %77, %cst_16 [2] : vector<4x8x8xf32> to vector<4x8xf32>
    %79 = vector.shape_cast %78 : vector<4x8xf32> to vector<4x8x1xf32>
    %80 = vector.broadcast %79 : vector<4x8x1xf32> to vector<4x8x8xf32>
    %81 = arith.subf %77, %80 : vector<4x8x8xf32>
    %82 = math.exp %81 : vector<4x8x8xf32>
    %cst_17 = arith.constant dense<0.000000e+00> : vector<4x8xf32>
    %83 = vector.multi_reduction <add>, %82, %cst_17 [2] : vector<4x8x8xf32> to vector<4x8xf32>
    %84 = vector.shape_cast %83 : vector<4x8xf32> to vector<4x8x1xf32>
    %85 = tpu.reciprocal %84 {approx = true} : vector<4x8x1xf32> -> vector<4x8x1xf32>
    %86 = vector.broadcast %85 : vector<4x8x1xf32> to vector<4x8x8xf32>
    %87 = arith.mulf %82, %86 : vector<4x8x8xf32>
    %88 = arith.truncf %87 : vector<4x8x8xf32> to vector<4x8x8xbf16>
    "tpu.trace_start"() <{level = 10 : i32, message = "gqk,gkd->gqd"}> : () -> ()
    %cst_18 = arith.constant dense<0.000000e+00> : vector<4x8x8xf32>
    %89 = tpu.matmul %88, %76, %cst_18 {dimension_numbers = #tpu.dot_dimension_numbers<[2], [1], [1], [2], [0, 0, 0, 1, 1, 2], [0], [0]>} : vector<4x8x8xbf16>, vector<4x8x8xbf16>, vector<4x8x8xf32> -> vector<4x8x8xf32>
    "tpu.trace_stop"() : () -> ()
    %90 = arith.truncf %89 : vector<4x8x8xf32> to vector<4x8x8xbf16>
    %c0_19 = arith.constant 0 : index
    %c0_20 = arith.constant 0 : index
    %c0_21 = arith.constant 0 : index
    %91 = vector.load %arg6[%c0_19, %c0_20, %c0_21] : memref<4x8x32xbf16, #tpu.memory_space<vmem>>, vector<4x8x32xbf16>
    "tpu.trace_start"() <{level = 10 : i32, message = "hrd,hdc->hrc"}> : () -> ()
    %cst_22 = arith.constant dense<0.000000e+00> : vector<4x8x32xf32>
    %92 = tpu.matmul %90, %91, %cst_22 {dimension_numbers = #tpu.dot_dimension_numbers<[2], [1], [1], [2], [0, 0, 0, 1, 1, 2], [0], [0]>} : vector<4x8x8xbf16>, vector<4x8x32xbf16>, vector<4x8x32xf32> -> vector<4x8x32xf32>
    "tpu.trace_stop"() : () -> ()
    %cst_23 = arith.constant dense<0.000000e+00> : vector<8x32xf32>
    %93 = vector.multi_reduction <add>, %92, %cst_23 [0] : vector<4x8x32xf32> to vector<8x32xf32>
    %c0_24 = arith.constant 0 : index
    %c0_25 = arith.constant 0 : index
    %94 = vector.load %arg7[%c0_24, %c0_25] : memref<1x32xf32, #tpu.memory_space<vmem>>, vector<1x32xf32>
    %95 = vector.shape_cast %94 : vector<1x32xf32> to vector<32xf32>
    %96 = vector.shape_cast %95 : vector<32xf32> to vector<1x32xf32>
    %97 = vector.broadcast %96 : vector<1x32xf32> to vector<8x32xf32>
    %98 = arith.addf %93, %97 : vector<8x32xf32>
    %99 = arith.addf %1, %98 : vector<8x32xf32>
    %c0_26 = arith.constant 0 : index
    %c0_27 = arith.constant 0 : index
    %100 = vector.load %arg8[%c0_26, %c0_27] : memref<1x32xf32, #tpu.memory_space<vmem>>, vector<1x32xf32>
    %101 = vector.shape_cast %100 : vector<1x32xf32> to vector<32xf32>
    %c0_28 = arith.constant 0 : index
    %c0_29 = arith.constant 0 : index
    %102 = vector.load %arg9[%c0_28, %c0_29] : memref<1x32xf32, #tpu.memory_space<vmem>>, vector<1x32xf32>
    %103 = vector.shape_cast %102 : vector<1x32xf32> to vector<32xf32>
    %cst_30 = arith.constant dense<0.000000e+00> : vector<8xf32>
    %104 = vector.multi_reduction <add>, %99, %cst_30 [1] : vector<8x32xf32> to vector<8xf32>
    %105 = vector.shape_cast %104 : vector<8xf32> to vector<8x1xf32>
    %cst_31 = arith.constant 3.200000e+01 : f32
    %106 = vector.broadcast %cst_31 : f32 to vector<8x1xf32>
    %107 = arith.divf %105, %106 : vector<8x1xf32>
    %108 = vector.broadcast %107 : vector<8x1xf32> to vector<8x32xf32>
    %109 = arith.subf %99, %108 : vector<8x32xf32>
    %110 = arith.mulf %109, %109 : vector<8x32xf32>
    %cst_32 = arith.constant dense<0.000000e+00> : vector<8xf32>
    %111 = vector.multi_reduction <add>, %110, %cst_32 [1] : vector<8x32xf32> to vector<8xf32>
    %112 = vector.shape_cast %111 : vector<8xf32> to vector<8x1xf32>
    %cst_33 = arith.constant 3.200000e+01 : f32
    %113 = vector.broadcast %cst_33 : f32 to vector<8x1xf32>
    %114 = arith.divf %112, %113 : vector<8x1xf32>
    %115 = vector.broadcast %107 : vector<8x1xf32> to vector<8x32xf32>
    %116 = arith.subf %99, %115 : vector<8x32xf32>
    %cst_34 = arith.constant 9.99999997E-7 : f32
    %117 = vector.broadcast %cst_34 : f32 to vector<8x1xf32>
    %118 = arith.addf %114, %117 : vector<8x1xf32>
    %119 = math.rsqrt %118 : vector<8x1xf32>
    %120 = vector.broadcast %119 : vector<8x1xf32> to vector<8x32xf32>
    %121 = arith.mulf %116, %120 : vector<8x32xf32>
    %122 = vector.shape_cast %101 : vector<32xf32> to vector<1x32xf32>
    %123 = vector.broadcast %122 : vector<1x32xf32> to vector<8x32xf32>
    %124 = arith.mulf %121, %123 : vector<8x32xf32>
    %125 = vector.shape_cast %103 : vector<32xf32> to vector<1x32xf32>
    %126 = vector.broadcast %125 : vector<1x32xf32> to vector<8x32xf32>
    %127 = arith.addf %124, %126 : vector<8x32xf32>
    %128 = arith.truncf %127 : vector<8x32xf32> to vector<8x32xbf16>
    %c0_35 = arith.constant 0 : index
    %c0_36 = arith.constant 0 : index
    %129 = vector.load %arg10[%c0_35, %c0_36] : memref<32x128xbf16, #tpu.memory_space<vmem>>, vector<32x128xbf16>
    %cst_37 = arith.constant dense<0.000000e+00> : vector<8x128xf32>
    %130 = tpu.matmul %128, %129, %cst_37 {dimension_numbers = #tpu.dot_dimension_numbers<[1], [0], [0], [1], [0, 0, 1, 1], [], []>} : vector<8x32xbf16>, vector<32x128xbf16>, vector<8x128xf32> -> vector<8x128xf32>
    %c0_38 = arith.constant 0 : index
    %c0_39 = arith.constant 0 : index
    %131 = vector.load %arg11[%c0_38, %c0_39] : memref<1x128xf32, #tpu.memory_space<vmem>>, vector<1x128xf32>
    %132 = vector.shape_cast %131 : vector<1x128xf32> to vector<128xf32>
    %133 = vector.shape_cast %132 : vector<128xf32> to vector<1x128xf32>
    %134 = vector.broadcast %133 : vector<1x128xf32> to vector<8x128xf32>
    %135 = arith.addf %130, %134 : vector<8x128xf32>
    %cst_40 = arith.constant 5.000000e-01 : f32
    %136 = vector.broadcast %cst_40 : f32 to vector<8x128xf32>
    %137 = arith.mulf %136, %135 : vector<8x128xf32>
    %138 = arith.mulf %135, %135 : vector<8x128xf32>
    %139 = arith.mulf %138, %135 : vector<8x128xf32>
    %cst_41 = arith.constant 4.471500e-02 : f32
    %140 = vector.broadcast %cst_41 : f32 to vector<8x128xf32>
    %141 = arith.mulf %140, %139 : vector<8x128xf32>
    %142 = arith.addf %135, %141 : vector<8x128xf32>
    %cst_42 = arith.constant 0.797884583 : f32
    %143 = vector.broadcast %cst_42 : f32 to vector<8x128xf32>
    %144 = arith.mulf %143, %142 : vector<8x128xf32>
    %145 = math.tanh %144 : vector<8x128xf32>
    %cst_43 = arith.constant 1.000000e+00 : f32
    %146 = vector.broadcast %cst_43 : f32 to vector<8x128xf32>
    %147 = arith.addf %146, %145 : vector<8x128xf32>
    %148 = arith.mulf %137, %147 : vector<8x128xf32>
    %149 = arith.truncf %148 : vector<8x128xf32> to vector<8x128xbf16>
    %c0_44 = arith.constant 0 : index
    %c0_45 = arith.constant 0 : index
    %150 = vector.load %arg12[%c0_44, %c0_45] : memref<128x32xbf16, #tpu.memory_space<vmem>>, vector<128x32xbf16>
    %cst_46 = arith.constant dense<0.000000e+00> : vector<8x32xf32>
    %151 = tpu.matmul %149, %150, %cst_46 {dimension_numbers = #tpu.dot_dimension_numbers<[1], [0], [0], [1], [0, 0, 1, 1], [], []>} : vector<8x128xbf16>, vector<128x32xbf16>, vector<8x32xf32> -> vector<8x32xf32>
    %c0_47 = arith.constant 0 : index
    %c0_48 = arith.constant 0 : index
    %152 = vector.load %arg13[%c0_47, %c0_48] : memref<1x32xf32, #tpu.memory_space<vmem>>, vector<1x32xf32>
    %153 = vector.shape_cast %152 : vector<1x32xf32> to vector<32xf32>
    %154 = vector.shape_cast %153 : vector<32xf32> to vector<1x32xf32>
    %155 = vector.broadcast %154 : vector<1x32xf32> to vector<8x32xf32>
    %156 = arith.addf %151, %155 : vector<8x32xf32>
    %157 = arith.addf %99, %156 : vector<8x32xf32>
    %158 = vector.shape_cast %157 : vector<8x32xf32> to vector<1x8x32xf32>
    %c0_49 = arith.constant 0 : index
    %c0_50 = arith.constant 0 : index
    %c0_51 = arith.constant 0 : index
    %159 = vector.load %arg14[%c0_49, %c0_50, %c0_51] : memref<1x8x32xf32, #tpu.memory_space<vmem>>, vector<1x8x32xf32>
    tpu.vector_store %arg14[%c0_49, %c0_50, %c0_51], %158 {strides = array<i32>} : memref<1x8x32xf32, #tpu.memory_space<vmem>>, vector<1x8x32xf32>,
    return
  }
  func.func @transform_0(%arg0: i32) -> (i32, i32, i32) {
    %c0_i32 = arith.constant 0 : i32
    %c0_i32_0 = arith.constant 0 : i32
    %c0_i32_1 = arith.constant 0 : i32
    return %arg0, %c0_i32, %c0_i32_0 : i32, i32, i32
  }
  func.func @transform_1(%arg0: i32) -> (i32, i32) {
    %c0_i32 = arith.constant 0 : i32
    %c0_i32_0 = arith.constant 0 : i32
    %c0_i32_1 = arith.constant 0 : i32
    return %c0_i32, %c0_i32_0 : i32, i32
  }
  func.func @transform_2(%arg0: i32) -> (i32, i32) {
    %c0_i32 = arith.constant 0 : i32
    %c0_i32_0 = arith.constant 0 : i32
    %c0_i32_1 = arith.constant 0 : i32
    return %c0_i32, %c0_i32_0 : i32, i32
  }
  func.func @transform_3(%arg0: i32) -> (i32, i32) {
    %c0_i32 = arith.constant 0 : i32
    %c0_i32_0 = arith.constant 0 : i32
    %c0_i32_1 = arith.constant 0 : i32
    return %c0_i32, %c0_i32_0 : i32, i32
  }
  func.func @transform_4(%arg0: i32) -> (i32, i32) {
    %c0_i32 = arith.constant 0 : i32
    %c0_i32_0 = arith.constant 0 : i32
    %c0_i32_1 = arith.constant 0 : i32
    return %c0_i32, %c0_i32_0 : i32, i32
  }
  func.func @transform_5(%arg0: i32) -> (i32, i32, i32) {
    %c0_i32 = arith.constant 0 : i32
    %c0_i32_0 = arith.constant 0 : i32
    %c0_i32_1 = arith.constant 0 : i32
    %c0_i32_2 = arith.constant 0 : i32
    return %c0_i32, %c0_i32_0, %c0_i32_1 : i32, i32, i32
  }
  func.func @transform_6(%arg0: i32) -> (i32, i32) {
    %c0_i32 = arith.constant 0 : i32
    %c0_i32_0 = arith.constant 0 : i32
    %c0_i32_1 = arith.constant 0 : i32
    return %c0_i32, %c0_i32_0 : i32, i32
  }
  func.func @transform_7(%arg0: i32) -> (i32, i32) {
    %c0_i32 = arith.constant 0 : i32
    %c0_i32_0 = arith.constant 0 : i32
    %c0_i32_1 = arith.constant 0 : i32
    return %c0_i32, %c0_i32_0 : i32, i32
  }
  func.func @transform_8(%arg0: i32) -> (i32, i32) {
    %c0_i32 = arith.constant 0 : i32
    %c0_i32_0 = arith.constant 0 : i32
    %c0_i32_1 = arith.constant 0 : i32
    return %c0_i32, %c0_i32_0 : i32, i32
  }
  func.func @transform_9(%arg0: i32) -> (i32, i32) {
    %c0_i32 = arith.constant 0 : i32
    %c0_i32_0 = arith.constant 0 : i32
    %c0_i32_1 = arith.constant 0 : i32
    return %c0_i32, %c0_i32_0 : i32, i32
  }
  func.func @transform_10(%arg0: i32) -> (i32, i32) {
    %c0_i32 = arith.constant 0 : i32
    %c0_i32_0 = arith.constant 0 : i32
    %c0_i32_1 = arith.constant 0 : i32
    return %c0_i32, %c0_i32_0 : i32, i32
  }
  func.func @transform_11(%arg0: i32) -> (i32, i32) {
    %c0_i32 = arith.constant 0 : i32
    %c0_i32_0 = arith.constant 0 : i32
    %c0_i32_1 = arith.constant 0 : i32
    return %c0_i32, %c0_i32_0 : i32, i32
  }
  func.func @transform_12(%arg0: i32) -> (i32, i32) {
    %c0_i32 = arith.constant 0 : i32
    %c0_i32_0 = arith.constant 0 : i32
    %c0_i32_1 = arith.constant 0 : i32
    return %c0_i32, %c0_i32_0 : i32, i32
  }
  func.func @transform_13(%arg0: i32) -> (i32, i32, i32) {
    %c0_i32 = arith.constant 0 : i32
    %c0_i32_0 = arith.constant 0 : i32
    %c0_i32_1 = arith.constant 0 : i32
    return %arg0, %c0_i32, %c0_i32_0 : i32, i32, i32
  }
}

</mosaic_0001>

<llo_original>
// kernel: tpu_custom_call.1
$region0: #{tpu_custom_call.1}
  #allocation0 [shape = 'u32[]', space=smem, size = 0x4, offset = 0x4, fixed_abs, tag = 'smem constant byte address 0x4 - core index']
  #allocation1 [shape = 'u32[72,128]{1,0:T(1,128)}', space=vmem, size = 0x9000, scoped, tag = 'internal scratch']
  %s0 = inlined_call_operand.vmem [shape: f32[2,8,32], index: 0, kind: input, shape index: {}]
  %s1 = inlined_call_operand.vmem [shape: f32[1,32], index: 1, kind: input, shape index: {}]
  %s2 = inlined_call_operand.vmem [shape: f32[1,32], index: 2, kind: input, shape index: {}]
  %s3 = inlined_call_operand.vmem [shape: bf16[32,96], index: 3, kind: input, shape index: {}]
  %s4 = inlined_call_operand.vmem [shape: f32[1,96], index: 4, kind: input, shape index: {}]
  %s5 = inlined_call_operand.vmem [shape: bf16[4,8,32], index: 5, kind: input, shape index: {}]
  %s6 = inlined_call_operand.vmem [shape: f32[1,32], index: 6, kind: input, shape index: {}]
  %s7 = inlined_call_operand.vmem [shape: f32[1,32], index: 7, kind: input, shape index: {}]
  %s8 = inlined_call_operand.vmem [shape: f32[1,32], index: 8, kind: input, shape index: {}]
  %s9 = inlined_call_operand.vmem [shape: bf16[32,128], index: 9, kind: input, shape index: {}]
  %s10 = inlined_call_operand.vmem [shape: f32[1,128], index: 10, kind: input, shape index: {}]
  %s11 = inlined_call_operand.vmem [shape: bf16[128,32], index: 11, kind: input, shape index: {}]
  %s12 = inlined_call_operand.vmem [shape: f32[1,32], index: 12, kind: input, shape index: {}]
  %s13 = inlined_call_operand.hbm [shape: f32[2,8,32], index: 13, kind: output, shape index: {}]
  %s14 = sld [smem:[#allocation0]]
  $region85: #{tpu_custom_call.1} parent=0
    _
  %s16 = ssub.s32 1, %s14
  %s17 = scalar_select 0, %s16, %s14
  $region1: #{tpu_custom_call.1} parent=0
    #allocation2 [shape = 'u8[8192]{0}', space=vmem, size = 0x2000, scoped, tag = 'output window, operand 0']
    #allocation3 [shape = 's32[2]{0}', space=sflag, size = 0x8, scoped, tag = 'scoped memory for tpu_custom_call.1']
    %18 = vsyncpa [#allocation3], 0
    %s19 = scalar_lea.sflag [#allocation3], 1
    %20 = vsyncpa %s19, 0
    loop: start=0, step=1, limit=4
    $region2: #{tpu_custom_call.1} parent=1 // loop_pre_header
      _
    $region3: #{tpu_custom_call.1} parent=1 // loop_header
      %s22 = sphi 0, %s26
      %p23 = scmp.ge.s32.totalorder %s22, 4
      %s32 = sphi 0, %s34
      %s35 = sphi 0, %s32
      %s36 = sphi 0, %s35
      %s52 = sphi 0, %s36
      %s56 = sphi 0, %s56
      %s58 = sphi 0, %s56
      %s59 = sphi 0, %s58
      %s73 = sphi 0, %s59
      %s77 = sphi 0, %s77
      %s79 = sphi 0, %s77
      %s80 = sphi 0, %s79
      %s94 = sphi 0, %s80
      %s98 = sphi 0, %s98
      %s100 = sphi 0, %s98
      %s101 = sphi 0, %s100
      %s115 = sphi 0, %s101
      %s119 = sphi 0, %s119
      %s121 = sphi 0, %s119
      %s122 = sphi 0, %s121
      %s136 = sphi 0, %s122
      %s140 = sphi 0, %s140
      %s142 = sphi 0, %s140
      %s143 = sphi 0, %s142
      %s157 = sphi 0, %s143
      %s161 = sphi 0, %s161
      %s163 = sphi 0, %s161
      %s164 = sphi 0, %s163
      %s178 = sphi 0, %s164
      %s182 = sphi 0, %s182
      %s184 = sphi 0, %s182
      %s185 = sphi 0, %s184
      %s199 = sphi 0, %s185
      %s203 = sphi 0, %s203
      %s205 = sphi 0, %s203
      %s206 = sphi 0, %s205
      %s220 = sphi 0, %s206
      %s224 = sphi 0, %s224
      %s226 = sphi 0, %s224
      %s227 = sphi 0, %s226
      %s241 = sphi 0, %s227
      %s245 = sphi 0, %s245
      %s247 = sphi 0, %s245
      %s248 = sphi 0, %s247
      %s262 = sphi 0, %s248
      %s266 = sphi 0, %s266
      %s268 = sphi 0, %s266
      %s269 = sphi 0, %s268
      %s283 = sphi 0, %s269
      %s287 = sphi 0, %s287
      %s289 = sphi 0, %s287
      %s290 = sphi 0, %s289
      %s304 = sphi 0, %s290
      %s310 = sphi 0, %s312
      %s313 = sphi 0, %s310
      %s314 = sphi 0, %s313
      %s330 = sphi 0, %s314
    $region4: #{tpu_custom_call.1} parent=1 // loop_header_branch
      %25 = sbr.rel (%p23) target = $region8
    $region5: #{tpu_custom_call.1} parent=1 // loop_body
      %s27 = ssub.s32 %s22, 1
      %s28 = ssub.s32 %s22, 2
      %s29 = sadd.s32 %s22, 1
      %s30 = ssub.s32 %s22, %s29
      %p31 = scmp.eq.s32.totalorder %s30, 0
      %s33 = sadd.s32 %s32, 1
      %s34 = scalar_select %p31, %s32, %s33
      %p37 = pneg %p31
      %p38 = scmp.eq.s32.totalorder %s22, 1
      %p39 = por %p37, %p38
      %p40 = scmp.ne.s32.totalorder %s32, %s35
      %p41 = scmp.eq.s32.totalorder %s22, 0
      %p42 = por %p40, %p41
      %p43 = scmp.ne.s32.totalorder %s32, %s35
      %p44 = scmp.eq.s32.totalorder %s27, 1
      %p45 = por %p43, %p44
      %p46 = scmp.ne.s32.totalorder %s35, %s36
      %p47 = scmp.eq.s32.totalorder %s27, 0
      %p48 = por %p46, %p47
      %p49 = scmp.ne.s32.totalorder %s35, %s36
      %p50 = scmp.eq.s32.totalorder %s28, 1
      %p51 = por %p49, %p50
      %p53 = scmp.ne.s32.totalorder %s36, %s52
      %p54 = scmp.eq.s32.totalorder %s28, 0
      %p55 = por %p53, %p54
      %s57 = sadd.s32 %s56, 1
      %p60 = scmp.eq.s32.totalorder %s22, 1
      %p61 = scmp.ne.s32.totalorder %s56, %s58
      %p62 = scmp.eq.s32.totalorder %s22, 0
      %p63 = por %p61, %p62
      %p64 = scmp.ne.s32.totalorder %s56, %s58
      %p65 = scmp.eq.s32.totalorder %s27, 1
      %p66 = por %p64, %p65
      %p67 = scmp.ne.s32.totalorder %s58, %s59
      %p68 = scmp.eq.s32.totalorder %s27, 0
      %p69 = por %p67, %p68
      %p70 = scmp.ne.s32.totalorder %s58, %s59
      %p71 = scmp.eq.s32.totalorder %s28, 1
      %p72 = por %p70, %p71
      %p74 = scmp.ne.s32.totalorder %s59, %s73
      %p75 = scmp.eq.s32.totalorder %s28, 0
      %p76 = por %p74, %p75
      %s78 = sadd.s32 %s77, 1
      %p81 = scmp.eq.s32.totalorder %s22, 1
      %p82 = scmp.ne.s32.totalorder %s77, %s79
      %p83 = scmp.eq.s32.totalorder %s22, 0
      %p84 = por %p82, %p83
      %p85 = scmp.ne.s32.totalorder %s77, %s79
      %p86 = scmp.eq.s32.totalorder %s27, 1
      %p87 = por %p85, %p86
      %p88 = scmp.ne.s32.totalorder %s79, %s80
      %p89 = scmp.eq.s32.totalorder %s27, 0
      %p90 = por %p88, %p89
      %p91 = scmp.ne.s32.totalorder %s79, %s80
      %p92 = scmp.eq.s32.totalorder %s28, 1
      %p93 = por %p91, %p92
      %p95 = scmp.ne.s32.totalorder %s80, %s94
      %p96 = scmp.eq.s32.totalorder %s28, 0
      %p97 = por %p95, %p96
      %s99 = sadd.s32 %s98, 1
      %p102 = scmp.eq.s32.totalorder %s22, 1
      %p103 = scmp.ne.s32.totalorder %s98, %s100
      %p104 = scmp.eq.s32.totalorder %s22, 0
      %p105 = por %p103, %p104
      %p106 = scmp.ne.s32.totalorder %s98, %s100
      %p107 = scmp.eq.s32.totalorder %s27, 1
      %p108 = por %p106, %p107
      %p109 = scmp.ne.s32.totalorder %s100, %s101
      %p110 = scmp.eq.s32.totalorder %s27, 0
      %p111 = por %p109, %p110
      %p112 = scmp.ne.s32.totalorder %s100, %s101
      %p113 = scmp.eq.s32.totalorder %s28, 1
      %p114 = por %p112, %p113
      %p116 = scmp.ne.s32.totalorder %s101, %s115
      %p117 = scmp.eq.s32.totalorder %s28, 0
      %p118 = por %p116, %p117
      %s120 = sadd.s32 %s119, 1
      %p123 = scmp.eq.s32.totalorder %s22, 1
      %p124 = scmp.ne.s32.totalorder %s119, %s121
      %p125 = scmp.eq.s32.totalorder %s22, 0
      %p126 = por %p124, %p125
      %p127 = scmp.ne.s32.totalorder %s119, %s121
      %p128 = scmp.eq.s32.totalorder %s27, 1
      %p129 = por %p127, %p128
      %p130 = scmp.ne.s32.totalorder %s121, %s122
      %p131 = scmp.eq.s32.totalorder %s27, 0
      %p132 = por %p130, %p131
      %p133 = scmp.ne.s32.totalorder %s121, %s122
      %p134 = scmp.eq.s32.totalorder %s28, 1
      %p135 = por %p133, %p134
      %p137 = scmp.ne.s32.totalorder %s122, %s136
      %p138 = scmp.eq.s32.totalorder %s28, 0
      %p139 = por %p137, %p138
      %s141 = sadd.s32 %s140, 1
      %p144 = scmp.eq.s32.totalorder %s22, 1
      %p145 = scmp.ne.s32.totalorder %s140, %s142
      %p146 = scmp.eq.s32.totalorder %s22, 0
      %p147 = por %p145, %p146
      %p148 = scmp.ne.s32.totalorder %s140, %s142
      %p149 = scmp.eq.s32.totalorder %s27, 1
      %p150 = por %p148, %p149
      %p151 = scmp.ne.s32.totalorder %s142, %s143
      %p152 = scmp.eq.s32.totalorder %s27, 0
      %p153 = por %p151, %p152
      %p154 = scmp.ne.s32.totalorder %s142, %s143
      %p155 = scmp.eq.s32.totalorder %s28, 1
      %p156 = por %p154, %p155
      %p158 = scmp.ne.s32.totalorder %s143, %s157
      %p159 = scmp.eq.s32.totalorder %s28, 0
      %p160 = por %p158, %p159
      %s162 = sadd.s32 %s161, 1
      %p165 = scmp.eq.s32.totalorder %s22, 1
      %p166 = scmp.ne.s32.totalorder %s161, %s163
      %p167 = scmp.eq.s32.totalorder %s22, 0
      %p168 = por %p166, %p167
      %p169 = scmp.ne.s32.totalorder %s161, %s163
      %p170 = scmp.eq.s32.totalorder %s27, 1
      %p171 = por %p169, %p170
      %p172 = scmp.ne.s32.totalorder %s163, %s164
      %p173 = scmp.eq.s32.totalorder %s27, 0
      %p174 = por %p172, %p173
      %p175 = scmp.ne.s32.totalorder %s163, %s164
      %p176 = scmp.eq.s32.totalorder %s28, 1
      %p177 = por %p175, %p176
      %p179 = scmp.ne.s32.totalorder %s164, %s178
      %p180 = scmp.eq.s32.totalorder %s28, 0
      %p181 = por %p179, %p180
      %s183 = sadd.s32 %s182, 1
      %p186 = scmp.eq.s32.totalorder %s22, 1
      %p187 = scmp.ne.s32.totalorder %s182, %s184
      %p188 = scmp.eq.s32.totalorder %s22, 0
      %p189 = por %p187, %p188
      %p190 = scmp.ne.s32.totalorder %s182, %s184
      %p191 = scmp.eq.s32.totalorder %s27, 1
      %p192 = por %p190, %p191
      %p193 = scmp.ne.s32.totalorder %s184, %s185
      %p194 = scmp.eq.s32.totalorder %s27, 0
      %p195 = por %p193, %p194
      %p196 = scmp.ne.s32.totalorder %s184, %s185
      %p197 = scmp.eq.s32.totalorder %s28, 1
      %p198 = por %p196, %p197
      %p200 = scmp.ne.s32.totalorder %s185, %s199
      %p201 = scmp.eq.s32.totalorder %s28, 0
      %p202 = por %p200, %p201
      %s204 = sadd.s32 %s203, 1
      %p207 = scmp.eq.s32.totalorder %s22, 1
      %p208 = scmp.ne.s32.totalorder %s203, %s205
      %p209 = scmp.eq.s32.totalorder %s22, 0
      %p210 = por %p208, %p209
      %p211 = scmp.ne.s32.totalorder %s203, %s205
      %p212 = scmp.eq.s32.totalorder %s27, 1
      %p213 = por %p211, %p212
      %p214 = scmp.ne.s32.totalorder %s205, %s206
      %p215 = scmp.eq.s32.totalorder %s27, 0
      %p216 = por %p214, %p215
      %p217 = scmp.ne.s32.totalorder %s205, %s206
      %p218 = scmp.eq.s32.totalorder %s28, 1
      %p219 = por %p217, %p218
      %p221 = scmp.ne.s32.totalorder %s206, %s220
      %p222 = scmp.eq.s32.totalorder %s28, 0
      %p223 = por %p221, %p222
      %s225 = sadd.s32 %s224, 1
      %p228 = scmp.eq.s32.totalorder %s22, 1
      %p229 = scmp.ne.s32.totalorder %s224, %s226
      %p230 = scmp.eq.s32.totalorder %s22, 0
      %p231 = por %p229, %p230
      %p232 = scmp.ne.s32.totalorder %s224, %s226
      %p233 = scmp.eq.s32.totalorder %s27, 1
      %p234 = por %p232, %p233
      %p235 = scmp.ne.s32.totalorder %s226, %s227
      %p236 = scmp.eq.s32.totalorder %s27, 0
      %p237 = por %p235, %p236
      %p238 = scmp.ne.s32.totalorder %s226, %s227
      %p239 = scmp.eq.s32.totalorder %s28, 1
      %p240 = por %p238, %p239
      %p242 = scmp.ne.s32.totalorder %s227, %s241
      %p243 = scmp.eq.s32.totalorder %s28, 0
      %p244 = por %p242, %p243
      %s246 = sadd.s32 %s245, 1
      %p249 = scmp.eq.s32.totalorder %s22, 1
      %p250 = scmp.ne.s32.totalorder %s245, %s247
      %p251 = scmp.eq.s32.totalorder %s22, 0
      %p252 = por %p250, %p251
      %p253 = scmp.ne.s32.totalorder %s245, %s247
      %p254 = scmp.eq.s32.totalorder %s27, 1
      %p255 = por %p253, %p254
      %p256 = scmp.ne.s32.totalorder %s247, %s248
      %p257 = scmp.eq.s32.totalorder %s27, 0
      %p258 = por %p256, %p257
      %p259 = scmp.ne.s32.totalorder %s247, %s248
      %p260 = scmp.eq.s32.totalorder %s28, 1
      %p261 = por %p259, %p260
      %p263 = scmp.ne.s32.totalorder %s248, %s262
      %p264 = scmp.eq.s32.totalorder %s28, 0
      %p265 = por %p263, %p264
      %s267 = sadd.s32 %s266, 1
      %p270 = scmp.eq.s32.totalorder %s22, 1
      %p271 = scmp.ne.s32.totalorder %s266, %s268
      %p272 = scmp.eq.s32.totalorder %s22, 0
      %p273 = por %p271, %p272
      %p274 = scmp.ne.s32.totalorder %s266, %s268
      %p275 = scmp.eq.s32.totalorder %s27, 1
      %p276 = por %p274, %p275
      %p277 = scmp.ne.s32.totalorder %s268, %s269
      %p278 = scmp.eq.s32.totalorder %s27, 0
      %p279 = por %p277, %p278
      %p280 = scmp.ne.s32.totalorder %s268, %s269
      %p281 = scmp.eq.s32.totalorder %s28, 1
      %p282 = por %p280, %p281
      %p284 = scmp.ne.s32.totalorder %s269, %s283
      %p285 = scmp.eq.s32.totalorder %s28, 0
      %p286 = por %p284, %p285
      %s288 = sadd.s32 %s287, 1
      %p291 = scmp.eq.s32.totalorder %s22, 1
      %p292 = scmp.ne.s32.totalorder %s287, %s289
      %p293 = scmp.eq.s32.totalorder %s22, 0
      %p294 = por %p292, %p293
      %p295 = scmp.ne.s32.totalorder %s287, %s289
      %p296 = scmp.eq.s32.totalorder %s27, 1
      %p297 = por %p295, %p296
      %p298 = scmp.ne.s32.totalorder %s289, %s290
      %p299 = scmp.eq.s32.totalorder %s27, 0
      %p300 = por %p298, %p299
      %p301 = scmp.ne.s32.totalorder %s289, %s290
      %p302 = scmp.eq.s32.totalorder %s28, 1
      %p303 = por %p301, %p302
      %p305 = scmp.ne.s32.totalorder %s290, %s304
      %p306 = scmp.eq.s32.totalorder %s28, 0
      %p307 = por %p305, %p306
      %s308 = ssub.s32 %s22, %s29
      %p309 = scmp.eq.s32.totalorder %s308, 0
      %s311 = sadd.s32 %s310, 1
      %s312 = scalar_select %p309, %s310, %s311
      %p315 = pneg %p309
      %p316 = scmp.eq.s32.totalorder %s22, 1
      %p317 = por %p315, %p316
      %p318 = scmp.ne.s32.totalorder %s310, %s313
      %p319 = scmp.eq.s32.totalorder %s22, 0
      %p320 = por %p318, %p319
      %p321 = scmp.ne.s32.totalorder %s310, %s313
      %p322 = scmp.eq.s32.totalorder %s27, 1
      %p323 = por %p321, %p322
      %p324 = scmp.ne.s32.totalorder %s313, %s314
      %p325 = scmp.eq.s32.totalorder %s27, 0
      %p326 = por %p324, %p325
      %p327 = scmp.ne.s32.totalorder %s313, %s314
      %p328 = scmp.eq.s32.totalorder %s28, 1
      %p329 = por %p327, %p328
      %p331 = scmp.ne.s32.totalorder %s314, %s330
      %p332 = scmp.eq.s32.totalorder %s28, 0
      %p333 = por %p331, %p332
      %p334 = scmp.le.s32.totalorder 1, %s22
      %p335 = scmp.lt.s32.totalorder %s22, 3
      %p336 = pnand %p334, %p335
      %p337 = pneg %p336
      // Predicated region
      $region9: #{tpu_custom_call.1} parent=5 // pred_check
        _
      $region10: #{tpu_custom_call.1} parent=5 // pred_check_branch
        %339 = sbr.rel (%p336) target = $region12
      $region11: #{tpu_custom_call.1} parent=5 // pred_region
        %s340 = ssub.s32 %s22, 1
        // Predicated region
        $region13: #{tpu_custom_call.1} parent=11 // pred_check
          %p341 = pneg %p69
        $region14: #{tpu_custom_call.1} parent=11 // pred_check_branch
          %343 = sbr.rel (%p341) target = $region16
        $region15: #{tpu_custom_call.1} parent=11 // pred_region
          _
        $region16: #{tpu_custom_call.1} parent=11 // pred_fallthru
          _
        // Predicated region
        $region17: #{tpu_custom_call.1} parent=11 // pred_check
          %p344 = pneg %p90
        $region18: #{tpu_custom_call.1} parent=11 // pred_check_branch
          %346 = sbr.rel (%p344) target = $region20
        $region19: #{tpu_custom_call.1} parent=11 // pred_region
          _
        $region20: #{tpu_custom_call.1} parent=11 // pred_fallthru
          _
        // Predicated region
        $region21: #{tpu_custom_call.1} parent=11 // pred_check
          %p347 = pneg %p111
        $region22: #{tpu_custom_call.1} parent=11 // pred_check_branch
          %349 = sbr.rel (%p347) target = $region24
        $region23: #{tpu_custom_call.1} parent=11 // pred_region
          _
        $region24: #{tpu_custom_call.1} parent=11 // pred_fallthru
          _
        // Predicated region
        $region25: #{tpu_custom_call.1} parent=11 // pred_check
          %p350 = pneg %p132
        $region26: #{tpu_custom_call.1} parent=11 // pred_check_branch
          %352 = sbr.rel (%p350) target = $region28
        $region27: #{tpu_custom_call.1} parent=11 // pred_region
          _
        $region28: #{tpu_custom_call.1} parent=11 // pred_fallthru
          _
        // Predicated region
        $region29: #{tpu_custom_call.1} parent=11 // pred_check
          %p353 = pneg %p153
        $region30: #{tpu_custom_call.1} parent=11 // pred_check_branch
          %355 = sbr.rel (%p353) target = $region32
        $region31: #{tpu_custom_call.1} parent=11 // pred_region
          _
        $region32: #{tpu_custom_call.1} parent=11 // pred_fallthru
          _
        // Predicated region
        $region33: #{tpu_custom_call.1} parent=11 // pred_check
          %p356 = pneg %p174
        $region34: #{tpu_custom_call.1} parent=11 // pred_check_branch
          %358 = sbr.rel (%p356) target = $region36
        $region35: #{tpu_custom_call.1} parent=11 // pred_region
          _
        $region36: #{tpu_custom_call.1} parent=11 // pred_fallthru
          _
        // Predicated region
        $region37: #{tpu_custom_call.1} parent=11 // pred_check
          %p359 = pneg %p195
        $region38: #{tpu_custom_call.1} parent=11 // pred_check_branch
          %361 = sbr.rel (%p359) target = $region40
        $region39: #{tpu_custom_call.1} parent=11 // pred_region
          _
        $region40: #{tpu_custom_call.1} parent=11 // pred_fallthru
          _
        // Predicated region
        $region41: #{tpu_custom_call.1} parent=11 // pred_check
          %p362 = pneg %p216
        $region42: #{tpu_custom_call.1} parent=11 // pred_check_branch
          %364 = sbr.rel (%p362) target = $region44
        $region43: #{tpu_custom_call.1} parent=11 // pred_region
          _
        $region44: #{tpu_custom_call.1} parent=11 // pred_fallthru
          _
        // Predicated region
        $region45: #{tpu_custom_call.1} parent=11 // pred_check
          %p365 = pneg %p237
        $region46: #{tpu_custom_call.1} parent=11 // pred_check_branch
          %367 = sbr.rel (%p365) target = $region48
        $region47: #{tpu_custom_call.1} parent=11 // pred_region
          _
        $region48: #{tpu_custom_call.1} parent=11 // pred_fallthru
          _
        // Predicated region
        $region49: #{tpu_custom_call.1} parent=11 // pred_check
          %p368 = pneg %p258
        $region50: #{tpu_custom_call.1} parent=11 // pred_check_branch
          %370 = sbr.rel (%p368) target = $region52
        $region51: #{tpu_custom_call.1} parent=11 // pred_region
          _
        $region52: #{tpu_custom_call.1} parent=11 // pred_fallthru
          _
        // Predicated region
        $region53: #{tpu_custom_call.1} parent=11 // pred_check
          %p371 = pneg %p279
        $region54: #{tpu_custom_call.1} parent=11 // pred_check_branch
          %373 = sbr.rel (%p371) target = $region56
        $region55: #{tpu_custom_call.1} parent=11 // pred_region
          _
        $region56: #{tpu_custom_call.1} parent=11 // pred_fallthru
          _
        // Predicated region
        $region57: #{tpu_custom_call.1} parent=11 // pred_check
          %p374 = pneg %p300
        $region58: #{tpu_custom_call.1} parent=11 // pred_check_branch
          %376 = sbr.rel (%p374) target = $region60
        $region59: #{tpu_custom_call.1} parent=11 // pred_region
          _
        $region60: #{tpu_custom_call.1} parent=11 // pred_fallthru
          _
      $region12: #{tpu_custom_call.1} parent=5 // pred_fallthru
        _
      %p377 = scmp.lt.s32.totalorder %s22, 2
      // Predicated region
      $region61: #{tpu_custom_call.1} parent=5 // pred_check
        %p378 = pneg %p377
      $region62: #{tpu_custom_call.1} parent=5 // pred_check_branch
        %380 = sbr.rel (%p378) target = $region64
      $region63: #{tpu_custom_call.1} parent=5 // pred_region
        // Predicated region
        $region65: #{tpu_custom_call.1} parent=63 // pred_check
          %p381 = pneg %p42
        $region66: #{tpu_custom_call.1} parent=63 // pred_check_branch
          %383 = sbr.rel (%p381) target = $region68
        $region67: #{tpu_custom_call.1} parent=63 // pred_region
          %p384 = scmp.lt.s32.totalorder %s22, 1
          %s385 = scalar_select %p384, %s22, 1
          %s386 = smul.addr %s385, 8
          %s387 = scalar_lea.vmem %s0, %s386
        $region68: #{tpu_custom_call.1} parent=63 // pred_fallthru
          _
      $region64: #{tpu_custom_call.1} parent=5 // pred_fallthru
        _
      %p388 = scmp.le.s32.totalorder 1, %s22
      %p389 = scmp.lt.s32.totalorder %s22, 3
      %p390 = pnand %p388, %p389
      %p391 = pneg %p390
      // Predicated region
      $region69: #{tpu_custom_call.1} parent=5 // pred_check
        _
      $region70: #{tpu_custom_call.1} parent=5 // pred_check_branch
        %393 = sbr.rel (%p390) target = $region72
      $region71: #{tpu_custom_call.1} parent=5 // pred_region
        %s394 = ssub.s32 %s22, 1
        %p395 = scmp.lt.s32.totalorder %s27, 1
        %s396 = scalar_select %p395, %s27, 1
        %s397 = smul.addr %s396, 8
        %s398 = scalar_lea.vmem %s0, %s397
        %p399 = pneg %p48
        %p400 = pneg %p45
        %p401 = pneg %p69
        %p402 = pneg %p66
        %p403 = pneg %p90
        %p404 = pneg %p87
        %p405 = pneg %p111
        %p406 = pneg %p108
        %p407 = pneg %p132
        %p408 = pneg %p129
        %p409 = pneg %p153
        %p410 = pneg %p150
        %p411 = pneg %p174
        %p412 = pneg %p171
        %p413 = pneg %p195
        %p414 = pneg %p192
        %p415 = pneg %p216
        %p416 = pneg %p213
        %p417 = pneg %p237
        %p418 = pneg %p234
        %p419 = pneg %p258
        %p420 = pneg %p255
        %p421 = pneg %p279
        %p422 = pneg %p276
        %p423 = pneg %p300
        %p424 = pneg %p297
        %p425 = pneg %p326
        %p426 = pneg %p323
        %s427 = sand.u32 %s313, 1
        %s428 = scalar_lea.sflag [#allocation3], %s427
        %s429 = sand.u32 %s313, 1
        %s430 = smul.addr %s429, 8
        %s431 = scalar_lea.vmem [#allocation2], %s430
        %p432 = scmp.lt.s32.totalorder %s27, 1
        %s433 = scalar_select %p432, %s27, 1
        %s434 = smul.addr %s433, 8
        %s435 = scalar_lea.vmem %s0, %s434
        %v437 = vld [vmem:[%s435] sm:$0xff]
        %v438 = vld [vmem:[%s1] sm:$0x1]
        %v439 = vld [vmem:[%s2] sm:$0x1]
        %vm440 = vcmask 261120
        %v441 = vsel %vm440, %v437, 0.0
        %442 = vadd.xlane.f32.xlu0 %v441
        %v443 = vpop.xlane.xlu0 %442
        %v444 = vrcp.pop 32.0
        %v445 = vmul.f32 32.0, %v444
        %v446 = vsub.f32 1.0, %v445
        %v447 = vmul.f32 %v444, %v446
        %v448 = vadd.f32 %v444, %v447
        %vm449 = vweird.f32 %v444
        %v450 = vsel %vm449, %v444, %v448
        %v451 = vmul.f32 %v443, %v450
        %v452 = vsub.f32 %v437, %v451
        %v453 = vmul.f32 %v452, %v452
        %v454 = vsel %vm440, %v453, 0.0
        %455 = vadd.xlane.f32.xlu0 %v454
        %v456 = vpop.xlane.xlu0 %455
        %v457 = vmul.f32 %v456, %v450
        %v458 = vadd.f32 %v457, 1e-06
        %v459 = vrsqrt.pop %v458
        %v460 = vmul.f32 %v459, %v458
        %v461 = vmul.f32 %v460, %v459
        %v462 = vmul.f32 0.5, %v461
        %v463 = vsub.f32 1.5, %v462
        %v464 = vmul.f32 %v459, %v463
        %vm465 = vweird.f32 %v458
        %vm466 = vweird.f32 %v459
        %vm467 = vmor %vm465, %vm466
        %v468 = vsel %vm467, %v459, %v464
        %v469 = vmul.f32 %v452, %v468
        %v471 = vperm.slane %v438, 0
        %v473 = vmul.f32 %v469, %v471
        %v475 = vperm.slane %v439, 0
        %v477 = vadd.f32 %v473, %v475
        %v478 = vpack.c.bf16 %v477, %v477
        %v479 = vld [vmem:[%s3] sm:$0xf]
        %v480 = vld [vmem:[%s3 + $0x4] sm:$0xf]
        %v481 = vld [vmem:[%s3 + $0x8] sm:$0xf]
        %v482 = vld [vmem:[%s3 + $0xc] sm:$0xf]
        %v483 = vld [vmem:[%s4] sm:$0x1]
        %v485 = vperm.slane %v483, 0
        %v491 = vunpack.c.l.b16 %v479
        %v492 = vunpack.c.l.b16 %v480
        %v493 = vunpack.c.l.b16 %v481
        %v494 = vunpack.c.l.b16 %v482
        %v495 = vpack.c.b16 %v492, %v491
        %v496 = vpack.c.b16 %v494, %v493
        %v500 = vsel %vm440, %v478, 0
        %502 = vmatpush.bf16.msra.mxu0 0
        %503 = vmatpush.bf16.msra.mxu0 0
        %504 = vmatpush.bf16.msra.mxu0 0
        %505 = vmatpush.bf16.msra.mxu0 0
        %506 = vmatpush.bf16.msra.mxu0 0
        %507 = vmatpush.bf16.msra.mxu0 0
        %508 = vmatpush.bf16.msra.mxu0 %v496
        %509 = vmatpush.bf16.msra.mxu0 %v495
        %510 = vmatmul.bf16.gmra.mxu0 %v500
        %v511 = vpop.f32.mrf.mxu0
        %v512 = vadd.f32 %v485, %v511
        %v513 = vpop.f32.mrf.mxu0
        %514 = vdwg.mxu0
        %v515 = vpack.c.bf16 %v512, %v512
        %517 = vrot.lane.b32.xlu0 %v515, 120
        %v518 = vpop.permute.xlu0 %517
        %519 = vrot.lane.b32.xlu0 %v515, 112
        %v520 = vpop.permute.xlu0 %519
        %521 = vrot.lane.b32.xlu0 %v515, 104
        %v522 = vpop.permute.xlu0 %521
        %v523 = vunpack.c.l.b16 %v515
        %v524 = vpack.c.b16 %v523, %v523
        %525 = vrot.lane.b32.xlu0 %v524, 96
        %v526 = vpop.permute.xlu0 %525
        %vm527 = vcmask 64512
        %v529 = vsel %vm527, %v515, 0
        %v532 = vsel %vm527, %v526, 0
        %534 = vmatpush.bf16.xpose.msra.mxu0 0
        %535 = vmatpush.bf16.xpose.msra.mxu0 0
        %536 = vmatpush.bf16.xpose.msra.mxu0 0
        %537 = vmatpush.bf16.xpose.msra.mxu0 0
        %538 = vmatpush.bf16.xpose.msra.mxu0 0
        %539 = vmatpush.bf16.xpose.msra.mxu0 0
        %540 = vmatpush.bf16.xpose.msra.mxu0 0
        %541 = vmatpush.bf16.xpose.msra.mxu0 %v532
        %542 = vmatmul.bf16.gmra.mxu0 %v529
        %v543 = vpop.f32.mrf.mxu0
        %v544 = vadd.f32 0.0, %v543
        %v545 = vpop.f32.mrf.mxu0
        %546 = vdwg.mxu0
        %v547 = vunpack.c.l.b16 %v518
        %v548 = vpack.c.b16 %v547, %v547
        %549 = vrot.lane.b32.xlu0 %v548, 96
        %v550 = vpop.permute.xlu0 %549
        %v552 = vsel %vm527, %v518, 0
        %v555 = vsel %vm527, %v550, 0
        %557 = vmatpush.bf16.xpose.msra.mxu0 0
        %558 = vmatpush.bf16.xpose.msra.mxu0 0
        %559 = vmatpush.bf16.xpose.msra.mxu0 0
        %560 = vmatpush.bf16.xpose.msra.mxu0 0
        %561 = vmatpush.bf16.xpose.msra.mxu0 0
        %562 = vmatpush.bf16.xpose.msra.mxu0 0
        %563 = vmatpush.bf16.xpose.msra.mxu0 0
        %564 = vmatpush.bf16.xpose.msra.mxu0 %v555
        %565 = vmatmul.bf16.gmra.mxu0 %v552
        %v566 = vpop.f32.mrf.mxu0
        %v567 = vadd.f32 0.0, %v566
        %v568 = vpop.f32.mrf.mxu0
        %569 = vdwg.mxu0
        %v570 = vunpack.c.l.b16 %v520
        %v571 = vpack.c.b16 %v570, %v570
        %572 = vrot.lane.b32.xlu0 %v571, 96
        %v573 = vpop.permute.xlu0 %572
        %v575 = vsel %vm527, %v520, 0
        %v578 = vsel %vm527, %v573, 0
        %580 = vmatpush.bf16.xpose.msra.mxu0 0
        %581 = vmatpush.bf16.xpose.msra.mxu0 0
        %582 = vmatpush.bf16.xpose.msra.mxu0 0
        %583 = vmatpush.bf16.xpose.msra.mxu0 0
        %584 = vmatpush.bf16.xpose.msra.mxu0 0
        %585 = vmatpush.bf16.xpose.msra.mxu0 0
        %586 = vmatpush.bf16.xpose.msra.mxu0 0
        %587 = vmatpush.bf16.xpose.msra.mxu0 %v578
        %588 = vmatmul.bf16.gmra.mxu0 %v575
        %v589 = vpop.f32.mrf.mxu0
        %v590 = vadd.f32 0.0, %v589
        %v591 = vpop.f32.mrf.mxu0
        %592 = vdwg.mxu0
        %v593 = vunpack.c.l.b16 %v522
        %v594 = vpack.c.b16 %v593, %v593
        %595 = vrot.lane.b32.xlu0 %v594, 96
        %v596 = vpop.permute.xlu0 %595
        %v598 = vsel %vm527, %v522, 0
        %v601 = vsel %vm527, %v596, 0
        %603 = vmatpush.bf16.xpose.msra.mxu0 0
        %604 = vmatpush.bf16.xpose.msra.mxu0 0
        %605 = vmatpush.bf16.xpose.msra.mxu0 0
        %606 = vmatpush.bf16.xpose.msra.mxu0 0
        %607 = vmatpush.bf16.xpose.msra.mxu0 0
        %608 = vmatpush.bf16.xpose.msra.mxu0 0
        %609 = vmatpush.bf16.xpose.msra.mxu0 0
        %610 = vmatpush.bf16.xpose.msra.mxu0 %v601
        %611 = vmatmul.bf16.gmra.mxu0 %v598
        %v612 = vpop.f32.mrf.mxu0
        %v613 = vadd.f32 0.0, %v612
        %v614 = vpop.f32.mrf.mxu0
        %615 = vdwg.mxu0
        %v616 = vsel %vm527, %v544, -inf
        %617 = vmax.xlane.f32.xlu0 %v616
        %v618 = vpop.xlane.xlu0 %617
        %v619 = vsel %vm527, %v567, -inf
        %620 = vmax.xlane.f32.xlu0 %v619
        %v621 = vpop.xlane.xlu0 %620
        %v622 = vsel %vm527, %v590, -inf
        %623 = vmax.xlane.f32.xlu0 %v622
        %v624 = vpop.xlane.xlu0 %623
        %v625 = vsel %vm527, %v613, -inf
        %626 = vmax.xlane.f32.xlu0 %v625
        %v627 = vpop.xlane.xlu0 %626
        %v628 = vsub.f32 %v544, %v618
        %v629 = vsub.f32 %v567, %v621
        %v630 = vsub.f32 %v590, %v624
        %v631 = vsub.f32 %v613, %v627
        %v632 = vmul.f32 %v628, 1.442695
        %v633 = vpow.pop %v632
        %v634 = vmul.f32 %v629, 1.442695
        %v635 = vpow.pop %v634
        %v636 = vmul.f32 %v630, 1.442695
        %v637 = vpow.pop %v636
        %v638 = vmul.f32 %v631, 1.442695
        %v639 = vpow.pop %v638
        %v640 = vsel %vm527, %v633, 0.0
        %641 = vadd.xlane.f32.xlu0 %v640
        %v642 = vpop.xlane.xlu0 %641
        %v643 = vsel %vm527, %v635, 0.0
        %644 = vadd.xlane.f32.xlu0 %v643
        %v645 = vpop.xlane.xlu0 %644
        %v646 = vsel %vm527, %v637, 0.0
        %647 = vadd.xlane.f32.xlu0 %v646
        %v648 = vpop.xlane.xlu0 %647
        %v649 = vsel %vm527, %v639, 0.0
        %650 = vadd.xlane.f32.xlu0 %v649
        %v651 = vpop.xlane.xlu0 %650
        %v652 = vrcp.pop %v642
        %v653 = vrcp.pop %v645
        %v654 = vrcp.pop %v648
        %v655 = vrcp.pop %v651
        %v656 = vmul.f32 %v633, %v652
        %v657 = vmul.f32 %v635, %v653
        %v658 = vmul.f32 %v637, %v654
        %v659 = vmul.f32 %v639, %v655
        %v660 = vpack.c.bf16 %v656, %v656
        %v661 = vpack.c.bf16 %v657, %v657
        %v662 = vpack.c.bf16 %v658, %v658
        %v663 = vpack.c.bf16 %v659, %v659
        %664 = vrot.lane.b32.xlu0 %v524, 64
        %v665 = vpop.permute.xlu0 %664
        %v667 = vsel %vm527, %v660, 0
        %vm669 = vcmask 1043456
        %v671 = vsel %vm669, %v665, 0
        %673 = vmatpush.bf16.msra.mxu0 0
        %674 = vmatpush.bf16.msra.mxu0 0
        %675 = vmatpush.bf16.msra.mxu0 0
        %676 = vmatpush.bf16.msra.mxu0 0
        %677 = vmatpush.bf16.msra.mxu0 0
        %678 = vmatpush.bf16.msra.mxu0 0
        %679 = vmatpush.bf16.msra.mxu0 0
        %680 = vmatpush.bf16.msra.mxu0 %v671
        %681 = vmatmul.bf16.gmra.mxu0 %v667
        %v682 = vpop.f32.mrf.mxu0
        %v683 = vadd.f32 0.0, %v682
        %v684 = vpop.f32.mrf.mxu0
        %685 = vdwg.mxu0
        %686 = vrot.lane.b32.xlu0 %v548, 64
        %v687 = vpop.permute.xlu0 %686
        %v689 = vsel %vm527, %v661, 0
        %v692 = vsel %vm669, %v687, 0
        %694 = vmatpush.bf16.msra.mxu0 0
        %695 = vmatpush.bf16.msra.mxu0 0
        %696 = vmatpush.bf16.msra.mxu0 0
        %697 = vmatpush.bf16.msra.mxu0 0
        %698 = vmatpush.bf16.msra.mxu0 0
        %699 = vmatpush.bf16.msra.mxu0 0
        %700 = vmatpush.bf16.msra.mxu0 0
        %701 = vmatpush.bf16.msra.mxu0 %v692
        %702 = vmatmul.bf16.gmra.mxu0 %v689
        %v703 = vpop.f32.mrf.mxu0
        %v704 = vadd.f32 0.0, %v703
        %v705 = vpop.f32.mrf.mxu0
        %706 = vdwg.mxu0
        %707 = vrot.lane.b32.xlu0 %v571, 64
        %v708 = vpop.permute.xlu0 %707
        %v710 = vsel %vm527, %v662, 0
        %v713 = vsel %vm669, %v708, 0
        %715 = vmatpush.bf16.msra.mxu0 0
        %716 = vmatpush.bf16.msra.mxu0 0
        %717 = vmatpush.bf16.msra.mxu0 0
        %718 = vmatpush.bf16.msra.mxu0 0
        %719 = vmatpush.bf16.msra.mxu0 0
        %720 = vmatpush.bf16.msra.mxu0 0
        %721 = vmatpush.bf16.msra.mxu0 0
        %722 = vmatpush.bf16.msra.mxu0 %v713
        %723 = vmatmul.bf16.gmra.mxu0 %v710
        %v724 = vpop.f32.mrf.mxu0
        %v725 = vadd.f32 0.0, %v724
        %v726 = vpop.f32.mrf.mxu0
        %727 = vdwg.mxu0
        %728 = vrot.lane.b32.xlu0 %v594, 64
        %v729 = vpop.permute.xlu0 %728
        %v731 = vsel %vm527, %v663, 0
        %v734 = vsel %vm669, %v729, 0
        %736 = vmatpush.bf16.msra.mxu0 0
        %737 = vmatpush.bf16.msra.mxu0 0
        %738 = vmatpush.bf16.msra.mxu0 0
        %739 = vmatpush.bf16.msra.mxu0 0
        %740 = vmatpush.bf16.msra.mxu0 0
        %741 = vmatpush.bf16.msra.mxu0 0
        %742 = vmatpush.bf16.msra.mxu0 0
        %743 = vmatpush.bf16.msra.mxu0 %v734
        %744 = vmatmul.bf16.gmra.mxu0 %v731
        %v745 = vpop.f32.mrf.mxu0
        %v746 = vadd.f32 0.0, %v745
        %v747 = vpop.f32.mrf.mxu0
        %748 = vdwg.mxu0
        %v749 = vpack.c.bf16 %v683, %v683
        %v750 = vpack.c.bf16 %v704, %v704
        %v751 = vpack.c.bf16 %v725, %v725
        %v752 = vpack.c.bf16 %v746, %v746
        %v753 = vld [vmem:[%s5] sm:$0xf]
        %v754 = vld [vmem:[%s5 + $0x4] sm:$0xf]
        %v755 = vld [vmem:[%s5 + $0x8] sm:$0xf]
        %v756 = vld [vmem:[%s5 + $0xc] sm:$0xf]
        %v758 = vsel %vm527, %v749, 0
        %v761 = vsel %vm669, %v753, 0
        %763 = vmatpush.bf16.msra.mxu0 0
        %764 = vmatpush.bf16.msra.mxu0 0
        %765 = vmatpush.bf16.msra.mxu0 0
        %766 = vmatpush.bf16.msra.mxu0 0
        %767 = vmatpush.bf16.msra.mxu0 0
        %768 = vmatpush.bf16.msra.mxu0 0
        %769 = vmatpush.bf16.msra.mxu0 0
        %770 = vmatpush.bf16.msra.mxu0 %v761
        %771 = vmatmul.bf16.gmra.mxu0 %v758
        %v772 = vpop.f32.mrf.mxu0
        %v773 = vadd.f32 0.0, %v772
        %v774 = vpop.f32.mrf.mxu0
        %775 = vdwg.mxu0
        %v777 = vsel %vm527, %v750, 0
        %v780 = vsel %vm669, %v754, 0
        %782 = vmatpush.bf16.msra.mxu0 0
        %783 = vmatpush.bf16.msra.mxu0 0
        %784 = vmatpush.bf16.msra.mxu0 0
        %785 = vmatpush.bf16.msra.mxu0 0
        %786 = vmatpush.bf16.msra.mxu0 0
        %787 = vmatpush.bf16.msra.mxu0 0
        %788 = vmatpush.bf16.msra.mxu0 0
        %789 = vmatpush.bf16.msra.mxu0 %v780
        %790 = vmatmul.bf16.gmra.mxu0 %v777
        %v791 = vpop.f32.mrf.mxu0
        %v792 = vadd.f32 0.0, %v791
        %v793 = vpop.f32.mrf.mxu0
        %794 = vdwg.mxu0
        %v796 = vsel %vm527, %v751, 0
        %v799 = vsel %vm669, %v755, 0
        %801 = vmatpush.bf16.msra.mxu0 0
        %802 = vmatpush.bf16.msra.mxu0 0
        %803 = vmatpush.bf16.msra.mxu0 0
        %804 = vmatpush.bf16.msra.mxu0 0
        %805 = vmatpush.bf16.msra.mxu0 0
        %806 = vmatpush.bf16.msra.mxu0 0
        %807 = vmatpush.bf16.msra.mxu0 0
        %808 = vmatpush.bf16.msra.mxu0 %v799
        %809 = vmatmul.bf16.gmra.mxu0 %v796
        %v810 = vpop.f32.mrf.mxu0
        %v811 = vadd.f32 0.0, %v810
        %v812 = vpop.f32.mrf.mxu0
        %813 = vdwg.mxu0
        %v815 = vsel %vm527, %v752, 0
        %v818 = vsel %vm669, %v756, 0
        %820 = vmatpush.bf16.msra.mxu0 0
        %821 = vmatpush.bf16.msra.mxu0 0
        %822 = vmatpush.bf16.msra.mxu0 0
        %823 = vmatpush.bf16.msra.mxu0 0
        %824 = vmatpush.bf16.msra.mxu0 0
        %825 = vmatpush.bf16.msra.mxu0 0
        %826 = vmatpush.bf16.msra.mxu0 0
        %827 = vmatpush.bf16.msra.mxu0 %v818
        %828 = vmatmul.bf16.gmra.mxu0 %v815
        %v829 = vpop.f32.mrf.mxu0
        %v830 = vadd.f32 0.0, %v829
        %v831 = vpop.f32.mrf.mxu0
        %832 = vdwg.mxu0
        %v833 = vsel %vm440, %v773, 0.0
        %v834 = vsel %vm440, %v792, 0.0
        %v835 = vadd.f32 %v833, %v834
        %v836 = vsel %vm440, %v811, 0.0
        %v837 = vadd.f32 %v835, %v836
        %v838 = vsel %vm440, %v830, 0.0
        %v839 = vadd.f32 %v837, %v838
        %v840 = vld [vmem:[%s6] sm:$0x1]
        %v842 = vperm.slane %v840, 0
        %v844 = vadd.f32 %v839, %v842
        %v845 = vadd.f32 %v437, %v844
        %v846 = vld [vmem:[%s7] sm:$0x1]
        %v847 = vld [vmem:[%s8] sm:$0x1]
        %v848 = vsel %vm440, %v845, 0.0
        %849 = vadd.xlane.f32.xlu0 %v848
        %v850 = vpop.xlane.xlu0 %849
        %v851 = vmul.f32 %v850, %v450
        %v852 = vsub.f32 %v845, %v851
        %v853 = vmul.f32 %v852, %v852
        %v854 = vsel %vm440, %v853, 0.0
        %855 = vadd.xlane.f32.xlu0 %v854
        %v856 = vpop.xlane.xlu0 %855
        %v857 = vmul.f32 %v856, %v450
        %v858 = vadd.f32 %v857, 1e-06
        %v859 = vrsqrt.pop %v858
        %v860 = vmul.f32 %v859, %v858
        %v861 = vmul.f32 %v860, %v859
        %v862 = vmul.f32 0.5, %v861
        %v863 = vsub.f32 1.5, %v862
        %v864 = vmul.f32 %v859, %v863
        %vm865 = vweird.f32 %v858
        %vm866 = vweird.f32 %v859
        %vm867 = vmor %vm865, %vm866
        %v868 = vsel %vm867, %v859, %v864
        %v869 = vmul.f32 %v852, %v868
        %v871 = vperm.slane %v846, 0
        %v873 = vmul.f32 %v869, %v871
        %v875 = vperm.slane %v847, 0
        %v877 = vadd.f32 %v873, %v875
        %v878 = vpack.c.bf16 %v877, %v877
        %v879 = vld [vmem:[%s9] sm:$0xf]
        %v880 = vld [vmem:[%s9 + $0x4] sm:$0xf]
        %v881 = vld [vmem:[%s9 + $0x8] sm:$0xf]
        %v882 = vld [vmem:[%s9 + $0xc] sm:$0xf]
        %v883 = vld [vmem:[%s10] sm:$0x1]
        %v885 = vperm.slane %v883, 0
        %v891 = vunpack.c.l.b16 %v879
        %v892 = vunpack.c.l.b16 %v880
        %v893 = vunpack.c.l.b16 %v881
        %v894 = vunpack.c.l.b16 %v882
        %v895 = vpack.c.b16 %v892, %v891
        %v896 = vpack.c.b16 %v894, %v893
        %v900 = vsel %vm440, %v878, 0
        %902 = vmatpush.bf16.msra.mxu0 0
        %903 = vmatpush.bf16.msra.mxu0 0
        %904 = vmatpush.bf16.msra.mxu0 0
        %905 = vmatpush.bf16.msra.mxu0 0
        %906 = vmatpush.bf16.msra.mxu0 0
        %907 = vmatpush.bf16.msra.mxu0 0
        %908 = vmatpush.bf16.msra.mxu0 %v896
        %909 = vmatpush.bf16.msra.mxu0 %v895
        %910 = vmatmul.bf16.gmra.mxu0 %v900
        %v911 = vpop.f32.mrf.mxu0
        %v912 = vadd.f32 %v885, %v911
        %v913 = vpop.f32.mrf.mxu0
        %914 = vdwg.mxu0
        %v915 = vmul.f32 %v912, 0.5
        %v916 = vmul.f32 %v912, %v912
        %v917 = vmul.f32 %v916, %v912
        %v918 = vmul.f32 %v917, 0.044715
        %v919 = vadd.f32 %v912, %v918
        %v920 = vmul.f32 %v919, 0.7978846
        %v921 = vtanh.pop %v920
        %v922 = vadd.f32 %v921, 1.0
        %v923 = vmul.f32 %v915, %v922
        %v924 = vpack.c.bf16 %v923, %v923
        %v925 = vld [vmem:[%s11] sm:$0xf]
        %v926 = vld [vmem:[%s11 + $0x4] sm:$0xf]
        %v927 = vld [vmem:[%s11 + $0x8] sm:$0xf]
        %v928 = vld [vmem:[%s11 + $0xc] sm:$0xf]
        %v929 = vld [vmem:[%s11 + $0x10] sm:$0xf]
        %v930 = vld [vmem:[%s11 + $0x14] sm:$0xf]
        %v931 = vld [vmem:[%s11 + $0x18] sm:$0xf]
        %v932 = vld [vmem:[%s11 + $0x1c] sm:$0xf]
        %v933 = vld [vmem:[%s11 + $0x20] sm:$0xf]
        %v934 = vld [vmem:[%s11 + $0x24] sm:$0xf]
        %v935 = vld [vmem:[%s11 + $0x28] sm:$0xf]
        %v936 = vld [vmem:[%s11 + $0x2c] sm:$0xf]
        %v937 = vld [vmem:[%s11 + $0x30] sm:$0xf]
        %v938 = vld [vmem:[%s11 + $0x34] sm:$0xf]
        %v939 = vld [vmem:[%s11 + $0x38] sm:$0xf]
        %v940 = vld [vmem:[%s11 + $0x3c] sm:$0xf]
        %v941 = vld [vmem:[%s12] sm:$0x1]
        %v943 = vperm.slane %v941, 0
        %v961 = vunpack.c.l.b16 %v925
        %v962 = vunpack.c.l.b16 %v926
        %v963 = vunpack.c.l.b16 %v927
        %v964 = vunpack.c.l.b16 %v928
        %v965 = vunpack.c.l.b16 %v929
        %v966 = vunpack.c.l.b16 %v930
        %v967 = vunpack.c.l.b16 %v931
        %v968 = vunpack.c.l.b16 %v932
        %v969 = vunpack.c.l.b16 %v933
        %v970 = vunpack.c.l.b16 %v934
        %v971 = vunpack.c.l.b16 %v935
        %v972 = vunpack.c.l.b16 %v936
        %v973 = vunpack.c.l.b16 %v937
        %v974 = vunpack.c.l.b16 %v938
        %v975 = vunpack.c.l.b16 %v939
        %v976 = vunpack.c.l.b16 %v940
        %v977 = vpack.c.b16 %v962, %v961
        %v978 = vpack.c.b16 %v964, %v963
        %v979 = vpack.c.b16 %v966, %v965
        %v980 = vpack.c.b16 %v968, %v967
        %v981 = vpack.c.b16 %v970, %v969
        %v982 = vpack.c.b16 %v972, %v971
        %v983 = vpack.c.b16 %v974, %v973
        %v984 = vpack.c.b16 %v976, %v975
        %993 = vmatpush.bf16.msra.mxu0 %v984
        %994 = vmatpush.bf16.msra.mxu0 %v983
        %995 = vmatpush.bf16.msra.mxu0 %v982
        %996 = vmatpush.bf16.msra.mxu0 %v981
        %997 = vmatpush.bf16.msra.mxu0 %v980
        %998 = vmatpush.bf16.msra.mxu0 %v979
        %999 = vmatpush.bf16.msra.mxu0 %v978
        %1000 = vmatpush.bf16.msra.mxu0 %v977
        %1001 = vmatmul.bf16.gmra.mxu0 %v924
        %v1002 = vpop.f32.mrf.mxu0
        %v1003 = vadd.f32 %v943, %v1002
        %v1004 = vpop.f32.mrf.mxu0
        %1005 = vdwg.mxu0
        %v1006 = vadd.f32 %v845, %v1003
        %1007 = vst.msk [vmem:[%s431] sm:$0xff] %vm440, %v1006
        %s1008 = sand.u32 %s313, 1
        %s1009 = scalar_lea.sflag [#allocation3], %s1008
        %s1010 = sand.u32 %s313, 1
        %s1011 = smul.addr %s1010, 8
        %s1012 = scalar_lea.vmem [#allocation2], %s1011
        // Predicated region
        $region73: #{tpu_custom_call.1} parent=71 // pred_check
          %p1013 = pneg %p323
        $region74: #{tpu_custom_call.1} parent=71 // pred_check_branch
          %1015 = sbr.rel (%p1013) target = $region76
        $region75: #{tpu_custom_call.1} parent=71 // pred_region
          %1017 = vsyncadd %s1009, 0
          %s1018 = smul.addr %s27, 8
          %s1019 = scalar_lea.hbm %s13, %s1018
          %s1021 = sshll.u32 %s1012, 4
          %s1022 = int_to_ptr.vmem [resolvable:$true] %s1021
          %s1023 = sshll.u32 %s1019, 4
          %s1024 = int_to_ptr.hbm [resolvable:$true] %s1023
          %1026 = dma.vmem_to_hbm [thread:$0]  %s1022, 128, %s1024, %s1009
        $region76: #{tpu_custom_call.1} parent=71 // pred_fallthru
          _
      $region72: #{tpu_custom_call.1} parent=5 // pred_fallthru
        _
      %p1027 = scmp.le.s32.totalorder 2, %s22
      // Predicated region
      $region77: #{tpu_custom_call.1} parent=5 // pred_check
        %p1028 = pneg %p1027
      $region78: #{tpu_custom_call.1} parent=5 // pred_check_branch
        %1030 = sbr.rel (%p1028) target = $region80
      $region79: #{tpu_custom_call.1} parent=5 // pred_region
        %s1031 = ssub.s32 %s22, 2
        // Predicated region
        $region81: #{tpu_custom_call.1} parent=79 // pred_check
          %p1032 = pneg %p329
        $region82: #{tpu_custom_call.1} parent=79 // pred_check_branch
          %1034 = sbr.rel (%p1032) target = $region84
        $region83: #{tpu_custom_call.1} parent=79 // pred_region
          %s1035 = sand.u32 %s314, 1
          %s1036 = scalar_lea.sflag [#allocation3], %s1035
          %s1037 = sand.u32 %s314, 1
          %s1038 = smul.addr %s1037, 8
          %s1039 = scalar_lea.vmem [#allocation2], %s1038
          %1041 = dma.done %s1036, 128
        $region84: #{tpu_custom_call.1} parent=79 // pred_fallthru
          _
      $region80: #{tpu_custom_call.1} parent=5 // pred_fallthru
        _
    $region6: #{tpu_custom_call.1} parent=1 // loop_footer
      %s26 = sadd.s32 1, %s22
    $region7: #{tpu_custom_call.1} parent=1 // loop_footer_branch
      %21 = sbr.rel target = $region3
    $region8: #{tpu_custom_call.1} parent=1 // loop_exit
      _
    %1042 = vsyncpa [#allocation3], 1
    %s1043 = scalar_lea.sflag [#allocation3], 1
    %1044 = vsyncpa %s1043, 1

</llo_original>
